<compile_context>
chip_gen: v7x
topology: tpu7x:2x2x1
jax: 0.10.0
libtpu: 0.0.40
codegen_flags: <defaults>
</compile_context>

<pallas_src>
import functools

import jax
import jax.numpy as jnp
from jax.experimental import pallas as pl
from jax.experimental.pallas import tpu as pltpu

# ---- model hyperparameters (small, consistent with the module) -------------
B = 2            # batch
T = 8            # sequence length (== block_size)
N_EMBD = 32      # C
NUM_HEADS = 4
HEAD_SIZE = 8    # num_heads * head_size == n_embd
BLOCK_SIZE = T
DROPOUT = 0.0    # eval-mode / identity


def _mha_kernel(x_ref, wqkv_ref, wp_ref, bp_ref, mbias_ref, o_ref, *,
                batch, seq, n_embd, num_heads, head_size):
    """Whole (B*T, C) problem in one grid step, fully resident in VMEM.

    x_ref     : (B*T, C)       activations (batch folded into rows)
    wqkv_ref  : (C, 3*H*D)     fused Q|K|V weight; scale pre-folded into Q cols
    wp_ref    : (C, C)         output projection weight
    bp_ref    : (1, C)         output projection bias
    mbias_ref : (B*T, B*T)     additive mask bias: 0 where attend, -1e30 else
    o_ref     : (B*T, C)       output
    """
    bt = batch * seq
    hd = num_heads * head_size

    x = x_ref[...]                                                   # (BT, C)

    # One fused QKV matmul instead of three separate MXU push/pop passes.
    qkv = jnp.dot(x, wqkv_ref[...], preferred_element_type=jnp.float32)  # (BT, 3HD)
    q_all = qkv[:, 0:hd]                 # already scaled by C**-0.5
    k_all = qkv[:, hd:2 * hd]
    v_all = qkv[:, 2 * hd:3 * hd]

    mbias = mbias_ref[...]               # (BT, BT) block-diagonal causal bias
    wp = wp_ref[...]                     # (C, C)

    acc = jnp.zeros((bt, n_embd), dtype=jnp.float32)

    for h in range(num_heads):           # static Python loop (unrolled)
        lo = h * head_size
        hi = lo + head_size
        q = q_all[:, lo:hi]              # (BT, D)
        k = k_all[:, lo:hi]              # (BT, D)
        v = v_all[:, lo:hi]              # (BT, D)

        # q @ k^T expressed directly via dot_general (contract on D).
        s = jax.lax.dot_general(q, k, (((1,), (1,)), ((), ())),
                                preferred_element_type=jnp.float32)  # (BT, BT)
        s = s + mbias                    # masked entries -> ~-1e30 (exp -> 0)

        # Softmax; the divide becomes an EUP approximate reciprocal.
        m = jnp.max(s, axis=-1, keepdims=True)
        p = jnp.exp(s - m)
        denom = jnp.sum(p, axis=-1, keepdims=True)
        p = p * pl.reciprocal(denom, approx=True)
        # TODO(synk): dropout on attention weights is identity in eval mode.

        head_out = jnp.dot(p, v, preferred_element_type=jnp.float32)     # (BT, D)
        # Distribute the output projection per head (no lane concatenation).
        acc = acc + jnp.dot(head_out, wp[lo:hi, :],
                            preferred_element_type=jnp.float32)          # (BT, C)

    # TODO(synk): output dropout is identity in eval mode.
    o_ref[...] = (acc + bp_ref[...]).astype(o_ref.dtype)


def multi_head_attention(x, wq, wk, wv, wp, bp, *,
                         num_heads=NUM_HEADS, head_size=HEAD_SIZE):
    Bx, Tx, Cx = x.shape
    hd = num_heads * head_size
    bt = Bx * Tx
    scale = float(Cx) ** -0.5            # matches the module: C**-0.5

    # One-time parameter transforms: fuse QKV and fold the attention scale
    # into the Q columns so the kernel never rescales score tiles.
    wqkv = jnp.concatenate([wq * scale, wk, wv], axis=-1)            # (C, 3HD)

    # Precomputed block-diagonal causal mask as an additive f32 bias
    # (0 = attend, -1e30 = masked); avoids in-kernel iota/compare/select.
    r = jnp.arange(bt)
    same_batch = (r[:, None] // Tx) == (r[None, :] // Tx)
    causal = r[None, :] <= r[:, None]
    mbias = jnp.where(same_batch & causal, 0.0, -1e30).astype(jnp.float32)

    # Fold batch into the M dimension: one grid step instead of B steps.
    x2 = x.reshape(bt, Cx)

    kernel = functools.partial(_mha_kernel, batch=Bx, seq=Tx, n_embd=Cx,
                               num_heads=num_heads, head_size=head_size)

    out2 = pl.pallas_call(
        kernel,
        out_shape=jax.ShapeDtypeStruct((bt, Cx), x.dtype),
        grid_spec=pltpu.PrefetchScalarGridSpec(
            num_scalar_prefetch=0,
            grid=(1,),
            in_specs=[
                pl.BlockSpec((bt, Cx), lambda i: (0, 0)),        # x (B folded)
                pl.BlockSpec((Cx, 3 * hd), lambda i: (0, 0)),    # fused Wqkv
                pl.BlockSpec((Cx, Cx), lambda i: (0, 0)),        # Wproj
                pl.BlockSpec((1, Cx), lambda i: (0, 0)),         # bproj
                pl.BlockSpec((bt, bt), lambda i: (0, 0)),        # mask bias
            ],
            out_specs=pl.BlockSpec((bt, Cx), lambda i: (0, 0)),
        ),
        compiler_params=pltpu.CompilerParams(
            dimension_semantics=("arbitrary",)),
    )(x2, wqkv, wp, bp, mbias)

    return out2.reshape(Bx, Tx, Cx)


def reference(x, wq, wk, wv, wp, bp):
    """Pure-JAX reference mirroring the PyTorch forward (eval mode)."""
    Bx, Tx, Cx = x.shape
    scale = float(Cx) ** -0.5
    q = x @ wq
    k = x @ wk
    v = x @ wv
    q = q.reshape(Bx, Tx, NUM_HEADS, HEAD_SIZE).transpose(0, 2, 1, 3)
    k = k.reshape(Bx, Tx, NUM_HEADS, HEAD_SIZE).transpose(0, 2, 1, 3)
    v = v.reshape(Bx, Tx, NUM_HEADS, HEAD_SIZE).transpose(0, 2, 1, 3)
    wei = jnp.einsum("bhqd,bhkd->bhqk", q, k) * scale
    mask = jnp.tril(jnp.ones((Tx, Tx), dtype=bool))
    wei = jnp.where(mask, wei, -jnp.inf)
    wei = jax.nn.softmax(wei, axis=-1)
    out = jnp.einsum("bhqk,bhkd->bhqd", wei, v)
    out = out.transpose(0, 2, 1, 3).reshape(Bx, Tx, Cx)
    return out @ wp + bp[0]


if __name__ == "__main__":
    key = jax.random.PRNGKey(0)
    kx, kq, kk, kv, kp, kb = jax.random.split(key, 6)

    HD = NUM_HEADS * HEAD_SIZE
    x = jax.random.normal(kx, (B, T, N_EMBD), dtype=jnp.float32)
    # Deterministic synthetic parameter init (scaled like nn.Linear fan-in).
    wq = jax.random.normal(kq, (N_EMBD, HD), dtype=jnp.float32) * (N_EMBD ** -0.5)
    wk = jax.random.normal(kk, (N_EMBD, HD), dtype=jnp.float32) * (N_EMBD ** -0.5)
    wv = jax.random.normal(kv, (N_EMBD, HD), dtype=jnp.float32) * (N_EMBD ** -0.5)
    wp = jax.random.normal(kp, (N_EMBD, N_EMBD), dtype=jnp.float32) * (N_EMBD ** -0.5)
    bp = jax.random.normal(kb, (1, N_EMBD), dtype=jnp.float32) * 0.01

    out = multi_head_attention(x, wq, wk, wv, wp, bp)
    out = jax.block_until_ready(out)

    ref = reference(x, wq, wk, wv, wp, bp)
    assert out.shape == (B, T, N_EMBD)
    # Tolerance slightly loosened because of the approximate (EUP) reciprocal
    # in the softmax denominator (~2^-12 relative error).
    assert jnp.allclose(out, ref, atol=2e-3, rtol=2e-3), "mismatch vs reference"
    print("KERNEL_OK")
</pallas_src>

<mosaic_0001>
module attributes {stable_mosaic.version = 11 : i64} {
  func.func @_mha_kernel(%arg0: i32, %arg1: memref<16x32xf32, #tpu.memory_space<vmem>>, %arg2: memref<32x96xf32, #tpu.memory_space<vmem>>, %arg3: memref<32x32xf32, #tpu.memory_space<vmem>>, %arg4: memref<1x32xf32, #tpu.memory_space<vmem>>, %arg5: memref<16x16xf32, #tpu.memory_space<vmem>>, %arg6: memref<16x32xf32, #tpu.memory_space<vmem>>) attributes {dimension_semantics = [#tpu.dimension_semantics<arbitrary>], iteration_bounds = array<i64: 1>, scalar_prefetch = 0 : i64, scratch_operands = 0 : i64, tpu.core_type = #tpu.core_type<tc>, window_params = [{pipeline_mode = #tpu.pipeline_mode<synchronous>, transform_indices = @transform_0, window_bounds = array<i64: 16, 32>}, {pipeline_mode = #tpu.pipeline_mode<synchronous>, transform_indices = @transform_1, window_bounds = array<i64: 32, 96>}, {pipeline_mode = #tpu.pipeline_mode<synchronous>, transform_indices = @transform_2, window_bounds = array<i64: 32, 32>}, {pipeline_mode = #tpu.pipeline_mode<synchronous>, transform_indices = @transform_3, window_bounds = array<i64: 1, 32>}, {pipeline_mode = #tpu.pipeline_mode<synchronous>, transform_indices = @transform_4, window_bounds = array<i64: 16, 16>}, {pipeline_mode = #tpu.pipeline_mode<synchronous>, transform_indices = @transform_5, window_bounds = array<i64: 16, 32>}]} {
    %c0 = arith.constant 0 : index
    %c0_0 = arith.constant 0 : index
    %0 = vector.load %arg1[%c0, %c0_0] : memref<16x32xf32, #tpu.memory_space<vmem>>, vector<16x32xf32>
    %c0_1 = arith.constant 0 : index
    %c0_2 = arith.constant 0 : index
    %1 = vector.load %arg2[%c0_1, %c0_2] : memref<32x96xf32, #tpu.memory_space<vmem>>, vector<32x96xf32>
    %cst = arith.constant dense<0.000000e+00> : vector<16x96xf32>
    %2 = tpu.matmul %0, %1, %cst {dimension_numbers = #tpu.dot_dimension_numbers<[1], [0], [0], [1], [0, 0, 1, 1], [], []>} : vector<16x32xf32>, vector<32x96xf32>, vector<16x96xf32> -> vector<16x96xf32>
    %3 = vector.extract_strided_slice %2 {offsets = [0, 0], sizes = [16, 32], strides = [1, 1]} : vector<16x96xf32> to vector<16x32xf32>
    %4 = vector.extract_strided_slice %2 {offsets = [0, 32], sizes = [16, 32], strides = [1, 1]} : vector<16x96xf32> to vector<16x32xf32>
    %5 = vector.extract_strided_slice %2 {offsets = [0, 64], sizes = [16, 32], strides = [1, 1]} : vector<16x96xf32> to vector<16x32xf32>
    %c0_3 = arith.constant 0 : index
    %c0_4 = arith.constant 0 : index
    %6 = vector.load %arg5[%c0_3, %c0_4] : memref<16x16xf32, #tpu.memory_space<vmem>>, vector<16x16xf32>
    %c0_5 = arith.constant 0 : index
    %c0_6 = arith.constant 0 : index
    %7 = vector.load %arg3[%c0_5, %c0_6] : memref<32x32xf32, #tpu.memory_space<vmem>>, vector<32x32xf32>
    %cst_7 = arith.constant 0.000000e+00 : f32
    %8 = vector.broadcast %cst_7 : f32 to vector<16x32xf32>
    %9 = vector.extract_strided_slice %3 {offsets = [0, 0], sizes = [16, 8], strides = [1, 1]} : vector<16x32xf32> to vector<16x8xf32>
    %10 = vector.extract_strided_slice %4 {offsets = [0, 0], sizes = [16, 8], strides = [1, 1]} : vector<16x32xf32> to vector<16x8xf32>
    %11 = vector.extract_strided_slice %5 {offsets = [0, 0], sizes = [16, 8], strides = [1, 1]} : vector<16x32xf32> to vector<16x8xf32>
    %cst_8 = arith.constant dense<0.000000e+00> : vector<16x16xf32>
    %12 = tpu.matmul %9, %10, %cst_8 {dimension_numbers = #tpu.dot_dimension_numbers<[1], [1], [0], [0], [0, 0, 1, 0], [], []>} : vector<16x8xf32>, vector<16x8xf32>, vector<16x16xf32> -> vector<16x16xf32>
    %13 = arith.addf %12, %6 : vector<16x16xf32>
    %cst_9 = arith.constant dense<0xFF800000> : vector<16xf32>
    %14 = vector.multi_reduction <maximumf>, %13, %cst_9 [1] : vector<16x16xf32> to vector<16xf32>
    %15 = vector.shape_cast %14 : vector<16xf32> to vector<16x1xf32>
    %16 = vector.broadcast %15 : vector<16x1xf32> to vector<16x16xf32>
    %17 = arith.subf %13, %16 : vector<16x16xf32>
    %18 = math.exp %17 : vector<16x16xf32>
    %cst_10 = arith.constant dense<0.000000e+00> : vector<16xf32>
    %19 = vector.multi_reduction <add>, %18, %cst_10 [1] : vector<16x16xf32> to vector<16xf32>
    %20 = vector.shape_cast %19 : vector<16xf32> to vector<16x1xf32>
    %21 = tpu.reciprocal %20 {approx = true} : vector<16x1xf32> -> vector<16x1xf32>
    %22 = vector.broadcast %21 : vector<16x1xf32> to vector<16x16xf32>
    %23 = arith.mulf %18, %22 : vector<16x16xf32>
    %cst_11 = arith.constant dense<0.000000e+00> : vector<16x8xf32>
    %24 = tpu.matmul %23, %11, %cst_11 {dimension_numbers = #tpu.dot_dimension_numbers<[1], [0], [0], [1], [0, 0, 1, 1], [], []>} : vector<16x16xf32>, vector<16x8xf32>, vector<16x8xf32> -> vector<16x8xf32>
    %25 = vector.extract_strided_slice %7 {offsets = [0, 0], sizes = [8, 32], strides = [1, 1]} : vector<32x32xf32> to vector<8x32xf32>
    %cst_12 = arith.constant dense<0.000000e+00> : vector<16x32xf32>
    %26 = tpu.matmul %24, %25, %cst_12 {dimension_numbers = #tpu.dot_dimension_numbers<[1], [0], [0], [1], [0, 0, 1, 1], [], []>} : vector<16x8xf32>, vector<8x32xf32>, vector<16x32xf32> -> vector<16x32xf32>
    %27 = arith.addf %8, %26 : vector<16x32xf32>
    %28 = vector.extract_strided_slice %3 {offsets = [0, 8], sizes = [16, 8], strides = [1, 1]} : vector<16x32xf32> to vector<16x8xf32>
    %29 = vector.extract_strided_slice %4 {offsets = [0, 8], sizes = [16, 8], strides = [1, 1]} : vector<16x32xf32> to vector<16x8xf32>
    %30 = vector.extract_strided_slice %5 {offsets = [0, 8], sizes = [16, 8], strides = [1, 1]} : vector<16x32xf32> to vector<16x8xf32>
    %cst_13 = arith.constant dense<0.000000e+00> : vector<16x16xf32>
    %31 = tpu.matmul %28, %29, %cst_13 {dimension_numbers = #tpu.dot_dimension_numbers<[1], [1], [0], [0], [0, 0, 1, 0], [], []>} : vector<16x8xf32>, vector<16x8xf32>, vector<16x16xf32> -> vector<16x16xf32>
    %32 = arith.addf %31, %6 : vector<16x16xf32>
    %cst_14 = arith.constant dense<0xFF800000> : vector<16xf32>
    %33 = vector.multi_reduction <maximumf>, %32, %cst_14 [1] : vector<16x16xf32> to vector<16xf32>
    %34 = vector.shape_cast %33 : vector<16xf32> to vector<16x1xf32>
    %35 = vector.broadcast %34 : vector<16x1xf32> to vector<16x16xf32>
    %36 = arith.subf %32, %35 : vector<16x16xf32>
    %37 = math.exp %36 : vector<16x16xf32>
    %cst_15 = arith.constant dense<0.000000e+00> : vector<16xf32>
    %38 = vector.multi_reduction <add>, %37, %cst_15 [1] : vector<16x16xf32> to vector<16xf32>
    %39 = vector.shape_cast %38 : vector<16xf32> to vector<16x1xf32>
    %40 = tpu.reciprocal %39 {approx = true} : vector<16x1xf32> -> vector<16x1xf32>
    %41 = vector.broadcast %40 : vector<16x1xf32> to vector<16x16xf32>
    %42 = arith.mulf %37, %41 : vector<16x16xf32>
    %cst_16 = arith.constant dense<0.000000e+00> : vector<16x8xf32>
    %43 = tpu.matmul %42, %30, %cst_16 {dimension_numbers = #tpu.dot_dimension_numbers<[1], [0], [0], [1], [0, 0, 1, 1], [], []>} : vector<16x16xf32>, vector<16x8xf32>, vector<16x8xf32> -> vector<16x8xf32>
    %44 = vector.extract_strided_slice %7 {offsets = [8, 0], sizes = [8, 32], strides = [1, 1]} : vector<32x32xf32> to vector<8x32xf32>
    %cst_17 = arith.constant dense<0.000000e+00> : vector<16x32xf32>
    %45 = tpu.matmul %43, %44, %cst_17 {dimension_numbers = #tpu.dot_dimension_numbers<[1], [0], [0], [1], [0, 0, 1, 1], [], []>} : vector<16x8xf32>, vector<8x32xf32>, vector<16x32xf32> -> vector<16x32xf32>
    %46 = arith.addf %27, %45 : vector<16x32xf32>
    %47 = vector.extract_strided_slice %3 {offsets = [0, 16], sizes = [16, 8], strides = [1, 1]} : vector<16x32xf32> to vector<16x8xf32>
    %48 = vector.extract_strided_slice %4 {offsets = [0, 16], sizes = [16, 8], strides = [1, 1]} : vector<16x32xf32> to vector<16x8xf32>
    %49 = vector.extract_strided_slice %5 {offsets = [0, 16], sizes = [16, 8], strides = [1, 1]} : vector<16x32xf32> to vector<16x8xf32>
    %cst_18 = arith.constant dense<0.000000e+00> : vector<16x16xf32>
    %50 = tpu.matmul %47, %48, %cst_18 {dimension_numbers = #tpu.dot_dimension_numbers<[1], [1], [0], [0], [0, 0, 1, 0], [], []>} : vector<16x8xf32>, vector<16x8xf32>, vector<16x16xf32> -> vector<16x16xf32>
    %51 = arith.addf %50, %6 : vector<16x16xf32>
    %cst_19 = arith.constant dense<0xFF800000> : vector<16xf32>
    %52 = vector.multi_reduction <maximumf>, %51, %cst_19 [1] : vector<16x16xf32> to vector<16xf32>
    %53 = vector.shape_cast %52 : vector<16xf32> to vector<16x1xf32>
    %54 = vector.broadcast %53 : vector<16x1xf32> to vector<16x16xf32>
    %55 = arith.subf %51, %54 : vector<16x16xf32>
    %56 = math.exp %55 : vector<16x16xf32>
    %cst_20 = arith.constant dense<0.000000e+00> : vector<16xf32>
    %57 = vector.multi_reduction <add>, %56, %cst_20 [1] : vector<16x16xf32> to vector<16xf32>
    %58 = vector.shape_cast %57 : vector<16xf32> to vector<16x1xf32>
    %59 = tpu.reciprocal %58 {approx = true} : vector<16x1xf32> -> vector<16x1xf32>
    %60 = vector.broadcast %59 : vector<16x1xf32> to vector<16x16xf32>
    %61 = arith.mulf %56, %60 : vector<16x16xf32>
    %cst_21 = arith.constant dense<0.000000e+00> : vector<16x8xf32>
    %62 = tpu.matmul %61, %49, %cst_21 {dimension_numbers = #tpu.dot_dimension_numbers<[1], [0], [0], [1], [0, 0, 1, 1], [], []>} : vector<16x16xf32>, vector<16x8xf32>, vector<16x8xf32> -> vector<16x8xf32>
    %63 = vector.extract_strided_slice %7 {offsets = [16, 0], sizes = [8, 32], strides = [1, 1]} : vector<32x32xf32> to vector<8x32xf32>
    %cst_22 = arith.constant dense<0.000000e+00> : vector<16x32xf32>
    %64 = tpu.matmul %62, %63, %cst_22 {dimension_numbers = #tpu.dot_dimension_numbers<[1], [0], [0], [1], [0, 0, 1, 1], [], []>} : vector<16x8xf32>, vector<8x32xf32>, vector<16x32xf32> -> vector<16x32xf32>
    %65 = arith.addf %46, %64 : vector<16x32xf32>
    %66 = vector.extract_strided_slice %3 {offsets = [0, 24], sizes = [16, 8], strides = [1, 1]} : vector<16x32xf32> to vector<16x8xf32>
    %67 = vector.extract_strided_slice %4 {offsets = [0, 24], sizes = [16, 8], strides = [1, 1]} : vector<16x32xf32> to vector<16x8xf32>
    %68 = vector.extract_strided_slice %5 {offsets = [0, 24], sizes = [16, 8], strides = [1, 1]} : vector<16x32xf32> to vector<16x8xf32>
    %cst_23 = arith.constant dense<0.000000e+00> : vector<16x16xf32>
    %69 = tpu.matmul %66, %67, %cst_23 {dimension_numbers = #tpu.dot_dimension_numbers<[1], [1], [0], [0], [0, 0, 1, 0], [], []>} : vector<16x8xf32>, vector<16x8xf32>, vector<16x16xf32> -> vector<16x16xf32>
    %70 = arith.addf %69, %6 : vector<16x16xf32>
    %cst_24 = arith.constant dense<0xFF800000> : vector<16xf32>
    %71 = vector.multi_reduction <maximumf>, %70, %cst_24 [1] : vector<16x16xf32> to vector<16xf32>
    %72 = vector.shape_cast %71 : vector<16xf32> to vector<16x1xf32>
    %73 = vector.broadcast %72 : vector<16x1xf32> to vector<16x16xf32>
    %74 = arith.subf %70, %73 : vector<16x16xf32>
    %75 = math.exp %74 : vector<16x16xf32>
    %cst_25 = arith.constant dense<0.000000e+00> : vector<16xf32>
    %76 = vector.multi_reduction <add>, %75, %cst_25 [1] : vector<16x16xf32> to vector<16xf32>
    %77 = vector.shape_cast %76 : vector<16xf32> to vector<16x1xf32>
    %78 = tpu.reciprocal %77 {approx = true} : vector<16x1xf32> -> vector<16x1xf32>
    %79 = vector.broadcast %78 : vector<16x1xf32> to vector<16x16xf32>
    %80 = arith.mulf %75, %79 : vector<16x16xf32>
    %cst_26 = arith.constant dense<0.000000e+00> : vector<16x8xf32>
    %81 = tpu.matmul %80, %68, %cst_26 {dimension_numbers = #tpu.dot_dimension_numbers<[1], [0], [0], [1], [0, 0, 1, 1], [], []>} : vector<16x16xf32>, vector<16x8xf32>, vector<16x8xf32> -> vector<16x8xf32>
    %82 = vector.extract_strided_slice %7 {offsets = [24, 0], sizes = [8, 32], strides = [1, 1]} : vector<32x32xf32> to vector<8x32xf32>
    %cst_27 = arith.constant dense<0.000000e+00> : vector<16x32xf32>
    %83 = tpu.matmul %81, %82, %cst_27 {dimension_numbers = #tpu.dot_dimension_numbers<[1], [0], [0], [1], [0, 0, 1, 1], [], []>} : vector<16x8xf32>, vector<8x32xf32>, vector<16x32xf32> -> vector<16x32xf32>
    %84 = arith.addf %65, %83 : vector<16x32xf32>
    %c0_28 = arith.constant 0 : index
    %c0_29 = arith.constant 0 : index
    %85 = vector.load %arg4[%c0_28, %c0_29] : memref<1x32xf32, #tpu.memory_space<vmem>>, vector<1x32xf32>
    %86 = vector.broadcast %85 : vector<1x32xf32> to vector<16x32xf32>
    %87 = arith.addf %84, %86 : vector<16x32xf32>
    %c0_30 = arith.constant 0 : index
    %c0_31 = arith.constant 0 : index
    %88 = vector.load %arg6[%c0_30, %c0_31] : memref<16x32xf32, #tpu.memory_space<vmem>>, vector<16x32xf32>
    tpu.vector_store %arg6[%c0_30, %c0_31], %87 {strides = array<i32>} : memref<16x32xf32, #tpu.memory_space<vmem>>, vector<16x32xf32>,
    return
  }
  func.func @transform_0(%arg0: i32) -> (i32, i32) {
    %c0_i32 = arith.constant 0 : i32
    %c0_i32_0 = arith.constant 0 : i32
    %c0_i32_1 = arith.constant 0 : i32
    return %c0_i32, %c0_i32_0 : i32, i32
  }
  func.func @transform_1(%arg0: i32) -> (i32, i32) {
    %c0_i32 = arith.constant 0 : i32
    %c0_i32_0 = arith.constant 0 : i32
    %c0_i32_1 = arith.constant 0 : i32
    return %c0_i32, %c0_i32_0 : i32, i32
  }
  func.func @transform_2(%arg0: i32) -> (i32, i32) {
    %c0_i32 = arith.constant 0 : i32
    %c0_i32_0 = arith.constant 0 : i32
    %c0_i32_1 = arith.constant 0 : i32
    return %c0_i32, %c0_i32_0 : i32, i32
  }
  func.func @transform_3(%arg0: i32) -> (i32, i32) {
    %c0_i32 = arith.constant 0 : i32
    %c0_i32_0 = arith.constant 0 : i32
    %c0_i32_1 = arith.constant 0 : i32
    return %c0_i32, %c0_i32_0 : i32, i32
  }
  func.func @transform_4(%arg0: i32) -> (i32, i32) {
    %c0_i32 = arith.constant 0 : i32
    %c0_i32_0 = arith.constant 0 : i32
    %c0_i32_1 = arith.constant 0 : i32
    return %c0_i32, %c0_i32_0 : i32, i32
  }
  func.func @transform_5(%arg0: i32) -> (i32, i32) {
    %c0_i32 = arith.constant 0 : i32
    %c0_i32_0 = arith.constant 0 : i32
    %c0_i32_1 = arith.constant 0 : i32
    return %c0_i32, %c0_i32_0 : i32, i32
  }
}

</mosaic_0001>

<llo_original>
// kernel: tpu_custom_call.1
$region0: #{tpu_custom_call.1}
  #allocation0 [shape = 'u32[]', space=smem, size = 0x4, offset = 0x4, fixed_abs, tag = 'smem constant byte address 0x4 - core index']
  #allocation1 [shape = 'u32[144,128]{1,0:T(1,128)}', space=vmem, size = 0x12000, scoped, tag = 'internal scratch']
  %s0 = inlined_call_operand.hbm [shape: f32[16,32], index: 0, kind: input, shape index: {}]
  %s1 = inlined_call_operand.hbm [shape: f32[32,96], index: 1, kind: input, shape index: {}]
  %s2 = inlined_call_operand.hbm [shape: f32[32,32], index: 2, kind: input, shape index: {}]
  %s3 = inlined_call_operand.vmem [shape: f32[1,32], index: 3, kind: input, shape index: {}]
  %s4 = inlined_call_operand.hbm [shape: f32[16,16], index: 4, kind: input, shape index: {}]
  %s5 = inlined_call_operand.hbm [shape: f32[16,32], index: 5, kind: output, shape index: {}]
  %s6 = sld [smem:[#allocation0]]
  $region46: #{tpu_custom_call.1} parent=0
    _
  %s8 = ssub.s32 1, %s6
  %s9 = scalar_select 0, %s8, %s6
  $region1: #{tpu_custom_call.1} parent=0
    #allocation2 [shape = 'u8[8192]{0}', space=vmem, size = 0x2000, scoped, tag = 'input window, operand 0, single buffered']
    #allocation3 [shape = 's32[1]{0}', space=sflag, size = 0x4, scoped, tag = 'scoped memory for tpu_custom_call.1']
    #allocation4 [shape = 's32[1]{0}', space=sflag, size = 0x4, scoped, tag = 'scoped memory for tpu_custom_call.1']
    #allocation5 [shape = 'u8[16384]{0}', space=vmem, size = 0x4000, scoped, tag = 'input window, operand 1, single buffered']
    #allocation6 [shape = 's32[1]{0}', space=sflag, size = 0x4, scoped, tag = 'scoped memory for tpu_custom_call.1']
    #allocation7 [shape = 'u8[16384]{0}', space=vmem, size = 0x4000, scoped, tag = 'input window, operand 2, single buffered']
    #allocation8 [shape = 'u8[8192]{0}', space=vmem, size = 0x2000, scoped, tag = 'input window, operand 4, single buffered']
    #allocation9 [shape = 's32[1]{0}', space=sflag, size = 0x4, scoped, tag = 'scoped memory for tpu_custom_call.1']
    #allocation10 [shape = 'u8[8192]{0}', space=vmem, size = 0x2000, scoped, tag = 'output window, operand 0, single buffered']
    %10 = vsyncpa [#allocation3], 0
    %11 = vsyncpa [#allocation6], 0
    %12 = vsyncpa [#allocation9], 0
    %13 = vsyncpa [#allocation4], 0
    // Predicated region
    $region2: #{tpu_custom_call.1} parent=1 // pred_check
      _
    $region3: #{tpu_custom_call.1} parent=1 // pred_check_branch
      %15 = sbr.rel (0) target = $region5
    $region4: #{tpu_custom_call.1} parent=1 // pred_region
      %s17 = ssub.s32 256, 256
      %18 = vsyncadd [#allocation3], %s17
      %s19 = sshll.u32 [#allocation2], 4
      %s20 = int_to_ptr.vmem [resolvable:$true] %s19
      %25 = dma.hbm_to_vmem [thread:$0]  %s0, 256, %s20, [#allocation3], 128, 128, 8
    $region5: #{tpu_custom_call.1} parent=1 // pred_fallthru
      _
    // Predicated region
    $region6: #{tpu_custom_call.1} parent=1 // pred_check
      _
    $region7: #{tpu_custom_call.1} parent=1 // pred_check_branch
      %27 = sbr.rel (0) target = $region9
    $region8: #{tpu_custom_call.1} parent=1 // pred_region
      %s29 = ssub.s32 512, 512
      %30 = vsyncadd [#allocation6], %s29
      %s31 = sshll.u32 [#allocation5], 4
      %s32 = int_to_ptr.vmem [resolvable:$true] %s31
      %37 = dma.hbm_to_vmem [thread:$0]  %s1, 512, %s32, [#allocation6], 128, 128, 8
    $region9: #{tpu_custom_call.1} parent=1 // pred_fallthru
      _
    // Predicated region
    $region10: #{tpu_custom_call.1} parent=1 // pred_check
      _
    $region11: #{tpu_custom_call.1} parent=1 // pred_check_branch
      %39 = sbr.rel (0) target = $region13
    $region12: #{tpu_custom_call.1} parent=1 // pred_region
      %s41 = ssub.s32 512, 512
      %42 = vsyncadd [#allocation6], %s41
      %s43 = sshll.u32 [#allocation7], 4
      %s44 = int_to_ptr.vmem [resolvable:$true] %s43
      %49 = dma.hbm_to_vmem [thread:$0]  %s2, 512, %s44, [#allocation6], 128, 128, 8
    $region13: #{tpu_custom_call.1} parent=1 // pred_fallthru
      _
    // Predicated region
    $region14: #{tpu_custom_call.1} parent=1 // pred_check
      _
    $region15: #{tpu_custom_call.1} parent=1 // pred_check_branch
      %51 = sbr.rel (0) target = $region17
    $region16: #{tpu_custom_call.1} parent=1 // pred_region
      _
    $region17: #{tpu_custom_call.1} parent=1 // pred_fallthru
      _
    // Predicated region
    $region18: #{tpu_custom_call.1} parent=1 // pred_check
      _
    $region19: #{tpu_custom_call.1} parent=1 // pred_check_branch
      %53 = sbr.rel (0) target = $region21
    $region20: #{tpu_custom_call.1} parent=1 // pred_region
      %s55 = ssub.s32 256, 256
      %56 = vsyncadd [#allocation9], %s55
      %s57 = sshll.u32 [#allocation8], 4
      %s58 = int_to_ptr.vmem [resolvable:$true] %s57
      %63 = dma.hbm_to_vmem [thread:$0]  %s4, 256, %s58, [#allocation9], 128, 128, 8
    $region21: #{tpu_custom_call.1} parent=1 // pred_fallthru
      _
    // Predicated region
    $region22: #{tpu_custom_call.1} parent=1 // pred_check
      _
    $region23: #{tpu_custom_call.1} parent=1 // pred_check_branch
      %65 = sbr.rel (0) target = $region25
    $region24: #{tpu_custom_call.1} parent=1 // pred_region
      %66 = dma.done [#allocation3], 256
    $region25: #{tpu_custom_call.1} parent=1 // pred_fallthru
      _
    // Predicated region
    $region26: #{tpu_custom_call.1} parent=1 // pred_check
      _
    $region27: #{tpu_custom_call.1} parent=1 // pred_check_branch
      %68 = sbr.rel (0) target = $region29
    $region28: #{tpu_custom_call.1} parent=1 // pred_region
      %69 = dma.done [#allocation6], 512
    $region29: #{tpu_custom_call.1} parent=1 // pred_fallthru
      _
    // Predicated region
    $region30: #{tpu_custom_call.1} parent=1 // pred_check
      _
    $region31: #{tpu_custom_call.1} parent=1 // pred_check_branch
      %71 = sbr.rel (0) target = $region33
    $region32: #{tpu_custom_call.1} parent=1 // pred_region
      %72 = dma.done [#allocation6], 512
    $region33: #{tpu_custom_call.1} parent=1 // pred_fallthru
      _
    // Predicated region
    $region34: #{tpu_custom_call.1} parent=1 // pred_check
      _
    $region35: #{tpu_custom_call.1} parent=1 // pred_check_branch
      %74 = sbr.rel (0) target = $region37
    $region36: #{tpu_custom_call.1} parent=1 // pred_region
      %75 = dma.done [#allocation9], 256
    $region37: #{tpu_custom_call.1} parent=1 // pred_fallthru
      _
    %v76 = vld [vmem:[#allocation2] sm:$0xff]
    %v77 = vld [vmem:[#allocation2 + $0x8] sm:$0xff]
    %v78 = vld [vmem:[#allocation5] sm:$0xff]
    %v79 = vld [vmem:[#allocation5 + $0x8] sm:$0xff]
    %v80 = vld [vmem:[#allocation5 + $0x10] sm:$0xff]
    %v81 = vld [vmem:[#allocation5 + $0x18] sm:$0xff]
    %vm82 = vcmask 261120
    %v84 = vsel %vm82, %v76, 0
    %v87 = vsel %vm82, %v77, 0
    %89 = vmatprep.subr.mxu0 0.0
    %90 = vmatpush1.msra.mxu0 %v78
    %91 = vmatprep.subr.mxu0 0.0
    %92 = vmatpush1.msra.mxu0 %v79
    %93 = vmatprep.subr.mxu0 0.0
    %94 = vmatpush1.msra.mxu0 %v80
    %95 = vmatprep.subr.mxu0 0.0
    %96 = vmatpush1.msra.mxu0 %v81
    %97 = vmatprep.subr.mxu0 0.0
    %98 = vmatpush1.msra.mxu0 0.0
    %99 = vmatprep.subr.mxu0 0.0
    %100 = vmatpush1.msra.mxu0 0.0
    %101 = vmatprep.subr.mxu0 0.0
    %102 = vmatpush1.msra.mxu0 0.0
    %103 = vmatprep.subr.mxu0 0.0
    %104 = vmatpush1.msra.mxu0 0.0
    %105 = vmatprep.subr.mxu0 0.0
    %106 = vmatpush1.msra.mxu0 0.0
    %107 = vmatprep.subr.mxu0 0.0
    %108 = vmatpush1.msra.mxu0 0.0
    %109 = vmatprep.subr.mxu0 0.0
    %110 = vmatpush1.msra.mxu0 0.0
    %111 = vmatprep.subr.mxu0 0.0
    %112 = vmatpush1.msra.mxu0 0.0
    %113 = vmatprep.subr.mxu0 0.0
    %114 = vmatpush1.msra.mxu0 0.0
    %115 = vmatprep.subr.mxu0 0.0
    %116 = vmatpush1.msra.mxu0 0.0
    %117 = vmatprep.subr.mxu0 0.0
    %118 = vmatpush1.msra.mxu0 0.0
    %119 = vmatprep.subr.mxu0 0.0
    %120 = vmatpush1.msra.mxu0 0.0
    %121 = vmatprep.subr.mxu0 0.0
    %122 = vmatpush1.msra.mxu0 0.0
    %123 = vmatprep.subr.mxu0 0.0
    %124 = vmatpush1.msra.mxu0 0.0
    %125 = vmatprep.subr.mxu0 0.0
    %126 = vmatpush1.msra.mxu0 0.0
    %127 = vmatprep.subr.mxu0 0.0
    %128 = vmatpush1.msra.mxu0 0.0
    %129 = vmatprep.subr.mxu0 0.0
    %130 = vmatpush1.msra.mxu0 0.0
    %131 = vmatprep.subr.mxu0 0.0
    %132 = vmatpush1.msra.mxu0 0.0
    %133 = vmatprep.subr.mxu0 0.0
    %134 = vmatpush1.msra.mxu0 0.0
    %135 = vmatprep.subr.mxu0 0.0
    %136 = vmatpush1.msra.mxu0 0.0
    %137 = vmatprep.subr.mxu0 0.0
    %138 = vmatpush1.msra.mxu0 0.0
    %139 = vmatprep.subr.mxu0 0.0
    %140 = vmatpush1.msra.mxu0 0.0
    %141 = vmatprep.subr.mxu0 0.0
    %142 = vmatpush1.msra.mxu0 0.0
    %143 = vmatprep.subr.mxu0 0.0
    %144 = vmatpush1.msra.mxu0 0.0
    %145 = vmatprep.subr.mxu0 0.0
    %146 = vmatpush1.msra.mxu0 0.0
    %147 = vmatprep.subr.mxu0 0.0
    %148 = vmatpush1.msra.mxu0 0.0
    %149 = vmatprep.subr.mxu0 0.0
    %150 = vmatpush1.msra.mxu0 0.0
    %151 = vmatprep.subr.mxu0 0.0
    %152 = vmatpush1.msra.mxu0 0.0
    %153 = vmatprep.mubr.f32.mxu0 0.0
    %154 = vmatmul.mubr.f32.gmra.mrb[0].mxu0 %v84
    %v155 = vpop.f32.mrb[0].mxu0
    %v156 = vadd.f32 0.0, %v155
    %v157 = vpop.f32.mrb[0].mxu0
    %158 = vmatprep.mubr.f32.mxu0 0.0
    %159 = vmatmul.mubr.f32.gmra.mrb[0].mxu0 %v87
    %v160 = vpop.f32.mrb[0].mxu0
    %v161 = vadd.f32 0.0, %v160
    %v162 = vpop.f32.mrb[0].mxu0
    %163 = vdwg.mxu0
    %v164 = vld [vmem:[#allocation8] sm:$0xff]
    %v165 = vld [vmem:[#allocation8 + $0x8] sm:$0xff]
    %v166 = vld [vmem:[#allocation7] sm:$0xff]
    %v167 = vld [vmem:[#allocation7 + $0x8] sm:$0xff]
    %v168 = vld [vmem:[#allocation7 + $0x10] sm:$0xff]
    %v169 = vld [vmem:[#allocation7 + $0x18] sm:$0xff]
    %172 = vrot.lane.b32.xlu0 %v156, 96
    %v173 = vpop.permute.xlu0 %172
    %174 = vrot.lane.b32.xlu0 %v161, 96
    %v175 = vpop.permute.xlu0 %174
    %vm176 = vcmask 64512
    %v177 = vsel %vm176, %v156, 0
    %v179 = vsel %vm176, %v161, 0
    %v181 = vsel %vm176, %v173, 0
    %v183 = vsel %vm176, %v175, 0
    %185 = vmatprep.subr.mxu0 0.0
    %186 = vmatpush1.xpose.msra.mxu0 %v181
    %187 = vmatprep.subr.mxu0 0.0
    %188 = vmatpush1.xpose.msra.mxu0 %v183
    %189 = vmatprep.subr.mxu0 0.0
    %190 = vmatpush1.xpose.msra.mxu0 0.0
    %191 = vmatprep.subr.mxu0 0.0
    %192 = vmatpush1.xpose.msra.mxu0 0.0
    %193 = vmatprep.subr.mxu0 0.0
    %194 = vmatpush1.xpose.msra.mxu0 0.0
    %195 = vmatprep.subr.mxu0 0.0
    %196 = vmatpush1.xpose.msra.mxu0 0.0
    %197 = vmatprep.subr.mxu0 0.0
    %198 = vmatpush1.xpose.msra.mxu0 0.0
    %199 = vmatprep.subr.mxu0 0.0
    %200 = vmatpush1.xpose.msra.mxu0 0.0
    %201 = vmatprep.subr.mxu0 0.0
    %202 = vmatpush1.xpose.msra.mxu0 0.0
    %203 = vmatprep.subr.mxu0 0.0
    %204 = vmatpush1.xpose.msra.mxu0 0.0
    %205 = vmatprep.subr.mxu0 0.0
    %206 = vmatpush1.xpose.msra.mxu0 0.0
    %207 = vmatprep.subr.mxu0 0.0
    %208 = vmatpush1.xpose.msra.mxu0 0.0
    %209 = vmatprep.subr.mxu0 0.0
    %210 = vmatpush1.xpose.msra.mxu0 0.0
    %211 = vmatprep.subr.mxu0 0.0
    %212 = vmatpush1.xpose.msra.mxu0 0.0
    %213 = vmatprep.subr.mxu0 0.0
    %214 = vmatpush1.xpose.msra.mxu0 0.0
    %215 = vmatprep.subr.mxu0 0.0
    %216 = vmatpush1.xpose.msra.mxu0 0.0
    %217 = vmatprep.subr.mxu0 0.0
    %218 = vmatpush1.xpose.msra.mxu0 0.0
    %219 = vmatprep.subr.mxu0 0.0
    %220 = vmatpush1.xpose.msra.mxu0 0.0
    %221 = vmatprep.subr.mxu0 0.0
    %222 = vmatpush1.xpose.msra.mxu0 0.0
    %223 = vmatprep.subr.mxu0 0.0
    %224 = vmatpush1.xpose.msra.mxu0 0.0
    %225 = vmatprep.subr.mxu0 0.0
    %226 = vmatpush1.xpose.msra.mxu0 0.0
    %227 = vmatprep.subr.mxu0 0.0
    %228 = vmatpush1.xpose.msra.mxu0 0.0
    %229 = vmatprep.subr.mxu0 0.0
    %230 = vmatpush1.xpose.msra.mxu0 0.0
    %231 = vmatprep.subr.mxu0 0.0
    %232 = vmatpush1.xpose.msra.mxu0 0.0
    %233 = vmatprep.subr.mxu0 0.0
    %234 = vmatpush1.xpose.msra.mxu0 0.0
    %235 = vmatprep.subr.mxu0 0.0
    %236 = vmatpush1.xpose.msra.mxu0 0.0
    %237 = vmatprep.subr.mxu0 0.0
    %238 = vmatpush1.xpose.msra.mxu0 0.0
    %239 = vmatprep.subr.mxu0 0.0
    %240 = vmatpush1.xpose.msra.mxu0 0.0
    %241 = vmatprep.subr.mxu0 0.0
    %242 = vmatpush1.xpose.msra.mxu0 0.0
    %243 = vmatprep.subr.mxu0 0.0
    %244 = vmatpush1.xpose.msra.mxu0 0.0
    %245 = vmatprep.subr.mxu0 0.0
    %246 = vmatpush1.xpose.msra.mxu0 0.0
    %247 = vmatprep.subr.mxu0 0.0
    %248 = vmatpush1.xpose.msra.mxu0 0.0
    %249 = vmatprep.mubr.f32.mxu0 0.0
    %250 = vmatmul.mubr.f32.gmra.mrb[0].mxu0 %v177
    %v251 = vpop.f32.mrb[0].mxu0
    %v252 = vadd.f32 %v164, %v251
    %v253 = vpop.f32.mrb[0].mxu0
    %254 = vmatprep.mubr.f32.mxu0 0.0
    %255 = vmatmul.mubr.f32.gmra.mrb[0].mxu0 %v179
    %v256 = vpop.f32.mrb[0].mxu0
    %v257 = vadd.f32 %v165, %v256
    %v258 = vpop.f32.mrb[0].mxu0
    %259 = vdwg.mxu0
    %vm260 = vcmask 130048
    %v261 = vsel %vm260, %v252, -inf
    %262 = vmax.xlane.f32.xlu0 %v261
    %v263 = vpop.xlane.xlu0 %262
    %v264 = vsel %vm260, %v257, -inf
    %265 = vmax.xlane.f32.xlu0 %v264
    %v266 = vpop.xlane.xlu0 %265
    %v267 = vsub.f32 %v252, %v263
    %v268 = vsub.f32 %v257, %v266
    %v269 = vmul.f32 %v267, 1.442695
    %v270 = vpow.pop %v269
    %v271 = vmul.f32 %v268, 1.442695
    %v272 = vpow.pop %v271
    %v273 = vsel %vm260, %v270, 0.0
    %274 = vadd.xlane.f32.xlu0 %v273
    %v275 = vpop.xlane.xlu0 %274
    %v276 = vsel %vm260, %v272, 0.0
    %277 = vadd.xlane.f32.xlu0 %v276
    %v278 = vpop.xlane.xlu0 %277
    %v279 = vrcp.pop %v275
    %v280 = vrcp.pop %v278
    %v281 = vmul.f32 %v270, %v279
    %v282 = vmul.f32 %v272, %v280
    %283 = vrot.lane.b32.xlu0 %v156, 64
    %v284 = vpop.permute.xlu0 %283
    %285 = vrot.lane.b32.xlu0 %v161, 64
    %v286 = vpop.permute.xlu0 %285
    %v290 = vsel %vm260, %v281, 0
    %v293 = vsel %vm260, %v282, 0
    %295 = vmatprep.subr.mxu0 0.0
    %296 = vmatpush1.msra.mxu0 %v284
    %297 = vmatprep.subr.mxu0 0.0
    %298 = vmatpush1.msra.mxu0 %v286
    %299 = vmatprep.subr.mxu0 0.0
    %300 = vmatpush1.msra.mxu0 0.0
    %301 = vmatprep.subr.mxu0 0.0
    %302 = vmatpush1.msra.mxu0 0.0
    %303 = vmatprep.subr.mxu0 0.0
    %304 = vmatpush1.msra.mxu0 0.0
    %305 = vmatprep.subr.mxu0 0.0
    %306 = vmatpush1.msra.mxu0 0.0
    %307 = vmatprep.subr.mxu0 0.0
    %308 = vmatpush1.msra.mxu0 0.0
    %309 = vmatprep.subr.mxu0 0.0
    %310 = vmatpush1.msra.mxu0 0.0
    %311 = vmatprep.subr.mxu0 0.0
    %312 = vmatpush1.msra.mxu0 0.0
    %313 = vmatprep.subr.mxu0 0.0
    %314 = vmatpush1.msra.mxu0 0.0
    %315 = vmatprep.subr.mxu0 0.0
    %316 = vmatpush1.msra.mxu0 0.0
    %317 = vmatprep.subr.mxu0 0.0
    %318 = vmatpush1.msra.mxu0 0.0
    %319 = vmatprep.subr.mxu0 0.0
    %320 = vmatpush1.msra.mxu0 0.0
    %321 = vmatprep.subr.mxu0 0.0
    %322 = vmatpush1.msra.mxu0 0.0
    %323 = vmatprep.subr.mxu0 0.0
    %324 = vmatpush1.msra.mxu0 0.0
    %325 = vmatprep.subr.mxu0 0.0
    %326 = vmatpush1.msra.mxu0 0.0
    %327 = vmatprep.subr.mxu0 0.0
    %328 = vmatpush1.msra.mxu0 0.0
    %329 = vmatprep.subr.mxu0 0.0
    %330 = vmatpush1.msra.mxu0 0.0
    %331 = vmatprep.subr.mxu0 0.0
    %332 = vmatpush1.msra.mxu0 0.0
    %333 = vmatprep.subr.mxu0 0.0
    %334 = vmatpush1.msra.mxu0 0.0
    %335 = vmatprep.subr.mxu0 0.0
    %336 = vmatpush1.msra.mxu0 0.0
    %337 = vmatprep.subr.mxu0 0.0
    %338 = vmatpush1.msra.mxu0 0.0
    %339 = vmatprep.subr.mxu0 0.0
    %340 = vmatpush1.msra.mxu0 0.0
    %341 = vmatprep.subr.mxu0 0.0
    %342 = vmatpush1.msra.mxu0 0.0
    %343 = vmatprep.subr.mxu0 0.0
    %344 = vmatpush1.msra.mxu0 0.0
    %345 = vmatprep.subr.mxu0 0.0
    %346 = vmatpush1.msra.mxu0 0.0
    %347 = vmatprep.subr.mxu0 0.0
    %348 = vmatpush1.msra.mxu0 0.0
    %349 = vmatprep.subr.mxu0 0.0
    %350 = vmatpush1.msra.mxu0 0.0
    %351 = vmatprep.subr.mxu0 0.0
    %352 = vmatpush1.msra.mxu0 0.0
    %353 = vmatprep.subr.mxu0 0.0
    %354 = vmatpush1.msra.mxu0 0.0
    %355 = vmatprep.subr.mxu0 0.0
    %356 = vmatpush1.msra.mxu0 0.0
    %357 = vmatprep.subr.mxu0 0.0
    %358 = vmatpush1.msra.mxu0 0.0
    %359 = vmatprep.mubr.f32.mxu0 0.0
    %360 = vmatmul.mubr.f32.gmra.mrb[0].mxu0 %v290
    %v361 = vpop.f32.mrb[0].mxu0
    %v362 = vadd.f32 0.0, %v361
    %v363 = vpop.f32.mrb[0].mxu0
    %364 = vmatprep.mubr.f32.mxu0 0.0
    %365 = vmatmul.mubr.f32.gmra.mrb[0].mxu0 %v293
    %v366 = vpop.f32.mrb[0].mxu0
    %v367 = vadd.f32 0.0, %v366
    %v368 = vpop.f32.mrb[0].mxu0
    %369 = vdwg.mxu0
    %370 = vrot.lane.b32.xlu0 %v156, 120
    %v371 = vpop.permute.xlu0 %370
    %372 = vrot.lane.b32.xlu0 %v161, 120
    %v373 = vpop.permute.xlu0 %372
    %374 = vrot.lane.b32.xlu0 %v156, 88
    %v375 = vpop.permute.xlu0 %374
    %376 = vrot.lane.b32.xlu0 %v161, 88
    %v377 = vpop.permute.xlu0 %376
    %v378 = vsel %vm176, %v371, 0
    %v380 = vsel %vm176, %v373, 0
    %v382 = vsel %vm176, %v375, 0
    %v384 = vsel %vm176, %v377, 0
    %386 = vmatprep.subr.mxu0 0.0
    %387 = vmatpush1.xpose.msra.mxu0 %v382
    %388 = vmatprep.subr.mxu0 0.0
    %389 = vmatpush1.xpose.msra.mxu0 %v384
    %390 = vmatprep.subr.mxu0 0.0
    %391 = vmatpush1.xpose.msra.mxu0 0.0
    %392 = vmatprep.subr.mxu0 0.0
    %393 = vmatpush1.xpose.msra.mxu0 0.0
    %394 = vmatprep.subr.mxu0 0.0
    %395 = vmatpush1.xpose.msra.mxu0 0.0
    %396 = vmatprep.subr.mxu0 0.0
    %397 = vmatpush1.xpose.msra.mxu0 0.0
    %398 = vmatprep.subr.mxu0 0.0
    %399 = vmatpush1.xpose.msra.mxu0 0.0
    %400 = vmatprep.subr.mxu0 0.0
    %401 = vmatpush1.xpose.msra.mxu0 0.0
    %402 = vmatprep.subr.mxu0 0.0
    %403 = vmatpush1.xpose.msra.mxu0 0.0
    %404 = vmatprep.subr.mxu0 0.0
    %405 = vmatpush1.xpose.msra.mxu0 0.0
    %406 = vmatprep.subr.mxu0 0.0
    %407 = vmatpush1.xpose.msra.mxu0 0.0
    %408 = vmatprep.subr.mxu0 0.0
    %409 = vmatpush1.xpose.msra.mxu0 0.0
    %410 = vmatprep.subr.mxu0 0.0
    %411 = vmatpush1.xpose.msra.mxu0 0.0
    %412 = vmatprep.subr.mxu0 0.0
    %413 = vmatpush1.xpose.msra.mxu0 0.0
    %414 = vmatprep.subr.mxu0 0.0
    %415 = vmatpush1.xpose.msra.mxu0 0.0
    %416 = vmatprep.subr.mxu0 0.0
    %417 = vmatpush1.xpose.msra.mxu0 0.0
    %418 = vmatprep.subr.mxu0 0.0
    %419 = vmatpush1.xpose.msra.mxu0 0.0
    %420 = vmatprep.subr.mxu0 0.0
    %421 = vmatpush1.xpose.msra.mxu0 0.0
    %422 = vmatprep.subr.mxu0 0.0
    %423 = vmatpush1.xpose.msra.mxu0 0.0
    %424 = vmatprep.subr.mxu0 0.0
    %425 = vmatpush1.xpose.msra.mxu0 0.0
    %426 = vmatprep.subr.mxu0 0.0
    %427 = vmatpush1.xpose.msra.mxu0 0.0
    %428 = vmatprep.subr.mxu0 0.0
    %429 = vmatpush1.xpose.msra.mxu0 0.0
    %430 = vmatprep.subr.mxu0 0.0
    %431 = vmatpush1.xpose.msra.mxu0 0.0
    %432 = vmatprep.subr.mxu0 0.0
    %433 = vmatpush1.xpose.msra.mxu0 0.0
    %434 = vmatprep.subr.mxu0 0.0
    %435 = vmatpush1.xpose.msra.mxu0 0.0
    %436 = vmatprep.subr.mxu0 0.0
    %437 = vmatpush1.xpose.msra.mxu0 0.0
    %438 = vmatprep.subr.mxu0 0.0
    %439 = vmatpush1.xpose.msra.mxu0 0.0
    %440 = vmatprep.subr.mxu0 0.0
    %441 = vmatpush1.xpose.msra.mxu0 0.0
    %442 = vmatprep.subr.mxu0 0.0
    %443 = vmatpush1.xpose.msra.mxu0 0.0
    %444 = vmatprep.subr.mxu0 0.0
    %445 = vmatpush1.xpose.msra.mxu0 0.0
    %446 = vmatprep.subr.mxu0 0.0
    %447 = vmatpush1.xpose.msra.mxu0 0.0
    %448 = vmatprep.subr.mxu0 0.0
    %449 = vmatpush1.xpose.msra.mxu0 0.0
    %450 = vmatprep.mubr.f32.mxu0 0.0
    %451 = vmatmul.mubr.f32.gmra.mrb[0].mxu0 %v378
    %v452 = vpop.f32.mrb[0].mxu0
    %v453 = vadd.f32 %v164, %v452
    %v454 = vpop.f32.mrb[0].mxu0
    %455 = vmatprep.mubr.f32.mxu0 0.0
    %456 = vmatmul.mubr.f32.gmra.mrb[0].mxu0 %v380
    %v457 = vpop.f32.mrb[0].mxu0
    %v458 = vadd.f32 %v165, %v457
    %v459 = vpop.f32.mrb[0].mxu0
    %460 = vdwg.mxu0
    %v461 = vsel %vm260, %v453, -inf
    %462 = vmax.xlane.f32.xlu0 %v461
    %v463 = vpop.xlane.xlu0 %462
    %v464 = vsel %vm260, %v458, -inf
    %465 = vmax.xlane.f32.xlu0 %v464
    %v466 = vpop.xlane.xlu0 %465
    %v467 = vsub.f32 %v453, %v463
    %v468 = vsub.f32 %v458, %v466
    %v469 = vmul.f32 %v467, 1.442695
    %v470 = vpow.pop %v469
    %v471 = vmul.f32 %v468, 1.442695
    %v472 = vpow.pop %v471
    %v473 = vsel %vm260, %v470, 0.0
    %474 = vadd.xlane.f32.xlu0 %v473
    %v475 = vpop.xlane.xlu0 %474
    %v476 = vsel %vm260, %v472, 0.0
    %477 = vadd.xlane.f32.xlu0 %v476
    %v478 = vpop.xlane.xlu0 %477
    %v479 = vrcp.pop %v475
    %v480 = vrcp.pop %v478
    %v481 = vmul.f32 %v470, %v479
    %v482 = vmul.f32 %v472, %v480
    %483 = vrot.lane.b32.xlu0 %v156, 56
    %v484 = vpop.permute.xlu0 %483
    %485 = vrot.lane.b32.xlu0 %v161, 56
    %v486 = vpop.permute.xlu0 %485
    %v490 = vsel %vm260, %v481, 0
    %v493 = vsel %vm260, %v482, 0
    %495 = vmatprep.subr.mxu0 0.0
    %496 = vmatpush1.msra.mxu0 %v484
    %497 = vmatprep.subr.mxu0 0.0
    %498 = vmatpush1.msra.mxu0 %v486
    %499 = vmatprep.subr.mxu0 0.0
    %500 = vmatpush1.msra.mxu0 0.0
    %501 = vmatprep.subr.mxu0 0.0
    %502 = vmatpush1.msra.mxu0 0.0
    %503 = vmatprep.subr.mxu0 0.0
    %504 = vmatpush1.msra.mxu0 0.0
    %505 = vmatprep.subr.mxu0 0.0
    %506 = vmatpush1.msra.mxu0 0.0
    %507 = vmatprep.subr.mxu0 0.0
    %508 = vmatpush1.msra.mxu0 0.0
    %509 = vmatprep.subr.mxu0 0.0
    %510 = vmatpush1.msra.mxu0 0.0
    %511 = vmatprep.subr.mxu0 0.0
    %512 = vmatpush1.msra.mxu0 0.0
    %513 = vmatprep.subr.mxu0 0.0
    %514 = vmatpush1.msra.mxu0 0.0
    %515 = vmatprep.subr.mxu0 0.0
    %516 = vmatpush1.msra.mxu0 0.0
    %517 = vmatprep.subr.mxu0 0.0
    %518 = vmatpush1.msra.mxu0 0.0
    %519 = vmatprep.subr.mxu0 0.0
    %520 = vmatpush1.msra.mxu0 0.0
    %521 = vmatprep.subr.mxu0 0.0
    %522 = vmatpush1.msra.mxu0 0.0
    %523 = vmatprep.subr.mxu0 0.0
    %524 = vmatpush1.msra.mxu0 0.0
    %525 = vmatprep.subr.mxu0 0.0
    %526 = vmatpush1.msra.mxu0 0.0
    %527 = vmatprep.subr.mxu0 0.0
    %528 = vmatpush1.msra.mxu0 0.0
    %529 = vmatprep.subr.mxu0 0.0
    %530 = vmatpush1.msra.mxu0 0.0
    %531 = vmatprep.subr.mxu0 0.0
    %532 = vmatpush1.msra.mxu0 0.0
    %533 = vmatprep.subr.mxu0 0.0
    %534 = vmatpush1.msra.mxu0 0.0
    %535 = vmatprep.subr.mxu0 0.0
    %536 = vmatpush1.msra.mxu0 0.0
    %537 = vmatprep.subr.mxu0 0.0
    %538 = vmatpush1.msra.mxu0 0.0
    %539 = vmatprep.subr.mxu0 0.0
    %540 = vmatpush1.msra.mxu0 0.0
    %541 = vmatprep.subr.mxu0 0.0
    %542 = vmatpush1.msra.mxu0 0.0
    %543 = vmatprep.subr.mxu0 0.0
    %544 = vmatpush1.msra.mxu0 0.0
    %545 = vmatprep.subr.mxu0 0.0
    %546 = vmatpush1.msra.mxu0 0.0
    %547 = vmatprep.subr.mxu0 0.0
    %548 = vmatpush1.msra.mxu0 0.0
    %549 = vmatprep.subr.mxu0 0.0
    %550 = vmatpush1.msra.mxu0 0.0
    %551 = vmatprep.subr.mxu0 0.0
    %552 = vmatpush1.msra.mxu0 0.0
    %553 = vmatprep.subr.mxu0 0.0
    %554 = vmatpush1.msra.mxu0 0.0
    %555 = vmatprep.subr.mxu0 0.0
    %556 = vmatpush1.msra.mxu0 0.0
    %557 = vmatprep.subr.mxu0 0.0
    %558 = vmatpush1.msra.mxu0 0.0
    %559 = vmatprep.mubr.f32.mxu0 0.0
    %560 = vmatmul.mubr.f32.gmra.mrb[0].mxu0 %v490
    %v561 = vpop.f32.mrb[0].mxu0
    %v562 = vadd.f32 0.0, %v561
    %v563 = vpop.f32.mrb[0].mxu0
    %564 = vmatprep.mubr.f32.mxu0 0.0
    %565 = vmatmul.mubr.f32.gmra.mrb[0].mxu0 %v493
    %v566 = vpop.f32.mrb[0].mxu0
    %v567 = vadd.f32 0.0, %v566
    %v568 = vpop.f32.mrb[0].mxu0
    %569 = vdwg.mxu0
    %v571 = vsel %vm176, %v562, 0
    %v574 = vsel %vm176, %v567, 0
    %576 = vmatprep.subr.mxu0 0.0
    %577 = vmatpush1.msra.mxu0 %v167
    %578 = vmatprep.subr.mxu0 0.0
    %579 = vmatpush1.msra.mxu0 0.0
    %580 = vmatprep.subr.mxu0 0.0
    %581 = vmatpush1.msra.mxu0 0.0
    %582 = vmatprep.subr.mxu0 0.0
    %583 = vmatpush1.msra.mxu0 0.0
    %584 = vmatprep.subr.mxu0 0.0
    %585 = vmatpush1.msra.mxu0 0.0
    %586 = vmatprep.subr.mxu0 0.0
    %587 = vmatpush1.msra.mxu0 0.0
    %588 = vmatprep.subr.mxu0 0.0
    %589 = vmatpush1.msra.mxu0 0.0
    %590 = vmatprep.subr.mxu0 0.0
    %591 = vmatpush1.msra.mxu0 0.0
    %592 = vmatprep.subr.mxu0 0.0
    %593 = vmatpush1.msra.mxu0 0.0
    %594 = vmatprep.subr.mxu0 0.0
    %595 = vmatpush1.msra.mxu0 0.0
    %596 = vmatprep.subr.mxu0 0.0
    %597 = vmatpush1.msra.mxu0 0.0
    %598 = vmatprep.subr.mxu0 0.0
    %599 = vmatpush1.msra.mxu0 0.0
    %600 = vmatprep.subr.mxu0 0.0
    %601 = vmatpush1.msra.mxu0 0.0
    %602 = vmatprep.subr.mxu0 0.0
    %603 = vmatpush1.msra.mxu0 0.0
    %604 = vmatprep.subr.mxu0 0.0
    %605 = vmatpush1.msra.mxu0 0.0
    %606 = vmatprep.subr.mxu0 0.0
    %607 = vmatpush1.msra.mxu0 0.0
    %608 = vmatprep.subr.mxu0 0.0
    %609 = vmatpush1.msra.mxu0 0.0
    %610 = vmatprep.subr.mxu0 0.0
    %611 = vmatpush1.msra.mxu0 0.0
    %612 = vmatprep.subr.mxu0 0.0
    %613 = vmatpush1.msra.mxu0 0.0
    %614 = vmatprep.subr.mxu0 0.0
    %615 = vmatpush1.msra.mxu0 0.0
    %616 = vmatprep.subr.mxu0 0.0
    %617 = vmatpush1.msra.mxu0 0.0
    %618 = vmatprep.subr.mxu0 0.0
    %619 = vmatpush1.msra.mxu0 0.0
    %620 = vmatprep.subr.mxu0 0.0
    %621 = vmatpush1.msra.mxu0 0.0
    %622 = vmatprep.subr.mxu0 0.0
    %623 = vmatpush1.msra.mxu0 0.0
    %624 = vmatprep.subr.mxu0 0.0
    %625 = vmatpush1.msra.mxu0 0.0
    %626 = vmatprep.subr.mxu0 0.0
    %627 = vmatpush1.msra.mxu0 0.0
    %628 = vmatprep.subr.mxu0 0.0
    %629 = vmatpush1.msra.mxu0 0.0
    %630 = vmatprep.subr.mxu0 0.0
    %631 = vmatpush1.msra.mxu0 0.0
    %632 = vmatprep.subr.mxu0 0.0
    %633 = vmatpush1.msra.mxu0 0.0
    %634 = vmatprep.subr.mxu0 0.0
    %635 = vmatpush1.msra.mxu0 0.0
    %636 = vmatprep.subr.mxu0 0.0
    %637 = vmatpush1.msra.mxu0 0.0
    %638 = vmatprep.subr.mxu0 0.0
    %639 = vmatpush1.msra.mxu0 0.0
    %640 = vmatprep.mubr.f32.mxu0 0.0
    %641 = vmatmul.mubr.f32.gmra.mrb[0].mxu0 %v571
    %v642 = vpop.f32.mrb[0].mxu0
    %v643 = vadd.f32 0.0, %v642
    %v644 = vpop.f32.mrb[0].mxu0
    %645 = vmatprep.mubr.f32.mxu0 0.0
    %646 = vmatmul.mubr.f32.gmra.mrb[0].mxu0 %v574
    %v647 = vpop.f32.mrb[0].mxu0
    %v648 = vadd.f32 0.0, %v647
    %v649 = vpop.f32.mrb[0].mxu0
    %650 = vdwg.mxu0
    %v652 = vsel %vm176, %v362, 0
    %v655 = vsel %vm176, %v367, 0
    %657 = vmatprep.subr.mxu0 0.0
    %658 = vmatpush1.msra.mxu0 %v166
    %659 = vmatprep.subr.mxu0 0.0
    %660 = vmatpush1.msra.mxu0 0.0
    %661 = vmatprep.subr.mxu0 0.0
    %662 = vmatpush1.msra.mxu0 0.0
    %663 = vmatprep.subr.mxu0 0.0
    %664 = vmatpush1.msra.mxu0 0.0
    %665 = vmatprep.subr.mxu0 0.0
    %666 = vmatpush1.msra.mxu0 0.0
    %667 = vmatprep.subr.mxu0 0.0
    %668 = vmatpush1.msra.mxu0 0.0
    %669 = vmatprep.subr.mxu0 0.0
    %670 = vmatpush1.msra.mxu0 0.0
    %671 = vmatprep.subr.mxu0 0.0
    %672 = vmatpush1.msra.mxu0 0.0
    %673 = vmatprep.subr.mxu0 0.0
    %674 = vmatpush1.msra.mxu0 0.0
    %675 = vmatprep.subr.mxu0 0.0
    %676 = vmatpush1.msra.mxu0 0.0
    %677 = vmatprep.subr.mxu0 0.0
    %678 = vmatpush1.msra.mxu0 0.0
    %679 = vmatprep.subr.mxu0 0.0
    %680 = vmatpush1.msra.mxu0 0.0
    %681 = vmatprep.subr.mxu0 0.0
    %682 = vmatpush1.msra.mxu0 0.0
    %683 = vmatprep.subr.mxu0 0.0
    %684 = vmatpush1.msra.mxu0 0.0
    %685 = vmatprep.subr.mxu0 0.0
    %686 = vmatpush1.msra.mxu0 0.0
    %687 = vmatprep.subr.mxu0 0.0
    %688 = vmatpush1.msra.mxu0 0.0
    %689 = vmatprep.subr.mxu0 0.0
    %690 = vmatpush1.msra.mxu0 0.0
    %691 = vmatprep.subr.mxu0 0.0
    %692 = vmatpush1.msra.mxu0 0.0
    %693 = vmatprep.subr.mxu0 0.0
    %694 = vmatpush1.msra.mxu0 0.0
    %695 = vmatprep.subr.mxu0 0.0
    %696 = vmatpush1.msra.mxu0 0.0
    %697 = vmatprep.subr.mxu0 0.0
    %698 = vmatpush1.msra.mxu0 0.0
    %699 = vmatprep.subr.mxu0 0.0
    %700 = vmatpush1.msra.mxu0 0.0
    %701 = vmatprep.subr.mxu0 0.0
    %702 = vmatpush1.msra.mxu0 0.0
    %703 = vmatprep.subr.mxu0 0.0
    %704 = vmatpush1.msra.mxu0 0.0
    %705 = vmatprep.subr.mxu0 0.0
    %706 = vmatpush1.msra.mxu0 0.0
    %707 = vmatprep.subr.mxu0 0.0
    %708 = vmatpush1.msra.mxu0 0.0
    %709 = vmatprep.subr.mxu0 0.0
    %710 = vmatpush1.msra.mxu0 0.0
    %711 = vmatprep.subr.mxu0 0.0
    %712 = vmatpush1.msra.mxu0 0.0
    %713 = vmatprep.subr.mxu0 0.0
    %714 = vmatpush1.msra.mxu0 0.0
    %715 = vmatprep.subr.mxu0 0.0
    %716 = vmatpush1.msra.mxu0 0.0
    %717 = vmatprep.subr.mxu0 0.0
    %718 = vmatpush1.msra.mxu0 0.0
    %719 = vmatprep.subr.mxu0 0.0
    %720 = vmatpush1.msra.mxu0 0.0
    %721 = vmatprep.mubr.f32.mxu0 0.0
    %722 = vmatmul.mubr.f32.gmra.mrb[0].mxu0 %v652
    %v723 = vpop.f32.mrb[0].mxu0
    %v724 = vadd.f32 %v643, %v723
    %v725 = vpop.f32.mrb[0].mxu0
    %726 = vmatprep.mubr.f32.mxu0 0.0
    %727 = vmatmul.mubr.f32.gmra.mrb[0].mxu0 %v655
    %v728 = vpop.f32.mrb[0].mxu0
    %v729 = vadd.f32 %v648, %v728
    %v730 = vpop.f32.mrb[0].mxu0
    %731 = vdwg.mxu0
    %732 = vrot.lane.b32.xlu0 %v156, 112
    %v733 = vpop.permute.xlu0 %732
    %734 = vrot.lane.b32.xlu0 %v161, 112
    %v735 = vpop.permute.xlu0 %734
    %736 = vrot.lane.b32.xlu0 %v156, 80
    %v737 = vpop.permute.xlu0 %736
    %738 = vrot.lane.b32.xlu0 %v161, 80
    %v739 = vpop.permute.xlu0 %738
    %v740 = vsel %vm176, %v733, 0
    %v742 = vsel %vm176, %v735, 0
    %v744 = vsel %vm176, %v737, 0
    %v746 = vsel %vm176, %v739, 0
    %748 = vmatprep.subr.mxu0 0.0
    %749 = vmatpush1.xpose.msra.mxu0 %v744
    %750 = vmatprep.subr.mxu0 0.0
    %751 = vmatpush1.xpose.msra.mxu0 %v746
    %752 = vmatprep.subr.mxu0 0.0
    %753 = vmatpush1.xpose.msra.mxu0 0.0
    %754 = vmatprep.subr.mxu0 0.0
    %755 = vmatpush1.xpose.msra.mxu0 0.0
    %756 = vmatprep.subr.mxu0 0.0
    %757 = vmatpush1.xpose.msra.mxu0 0.0
    %758 = vmatprep.subr.mxu0 0.0
    %759 = vmatpush1.xpose.msra.mxu0 0.0
    %760 = vmatprep.subr.mxu0 0.0
    %761 = vmatpush1.xpose.msra.mxu0 0.0
    %762 = vmatprep.subr.mxu0 0.0
    %763 = vmatpush1.xpose.msra.mxu0 0.0
    %764 = vmatprep.subr.mxu0 0.0
    %765 = vmatpush1.xpose.msra.mxu0 0.0
    %766 = vmatprep.subr.mxu0 0.0
    %767 = vmatpush1.xpose.msra.mxu0 0.0
    %768 = vmatprep.subr.mxu0 0.0
    %769 = vmatpush1.xpose.msra.mxu0 0.0
    %770 = vmatprep.subr.mxu0 0.0
    %771 = vmatpush1.xpose.msra.mxu0 0.0
    %772 = vmatprep.subr.mxu0 0.0
    %773 = vmatpush1.xpose.msra.mxu0 0.0
    %774 = vmatprep.subr.mxu0 0.0
    %775 = vmatpush1.xpose.msra.mxu0 0.0
    %776 = vmatprep.subr.mxu0 0.0
    %777 = vmatpush1.xpose.msra.mxu0 0.0
    %778 = vmatprep.subr.mxu0 0.0
    %779 = vmatpush1.xpose.msra.mxu0 0.0
    %780 = vmatprep.subr.mxu0 0.0
    %781 = vmatpush1.xpose.msra.mxu0 0.0
    %782 = vmatprep.subr.mxu0 0.0
    %783 = vmatpush1.xpose.msra.mxu0 0.0
    %784 = vmatprep.subr.mxu0 0.0
    %785 = vmatpush1.xpose.msra.mxu0 0.0
    %786 = vmatprep.subr.mxu0 0.0
    %787 = vmatpush1.xpose.msra.mxu0 0.0
    %788 = vmatprep.subr.mxu0 0.0
    %789 = vmatpush1.xpose.msra.mxu0 0.0
    %790 = vmatprep.subr.mxu0 0.0
    %791 = vmatpush1.xpose.msra.mxu0 0.0
    %792 = vmatprep.subr.mxu0 0.0
    %793 = vmatpush1.xpose.msra.mxu0 0.0
    %794 = vmatprep.subr.mxu0 0.0
    %795 = vmatpush1.xpose.msra.mxu0 0.0
    %796 = vmatprep.subr.mxu0 0.0
    %797 = vmatpush1.xpose.msra.mxu0 0.0
    %798 = vmatprep.subr.mxu0 0.0
    %799 = vmatpush1.xpose.msra.mxu0 0.0
    %800 = vmatprep.subr.mxu0 0.0
    %801 = vmatpush1.xpose.msra.mxu0 0.0
    %802 = vmatprep.subr.mxu0 0.0
    %803 = vmatpush1.xpose.msra.mxu0 0.0
    %804 = vmatprep.subr.mxu0 0.0
    %805 = vmatpush1.xpose.msra.mxu0 0.0
    %806 = vmatprep.subr.mxu0 0.0
    %807 = vmatpush1.xpose.msra.mxu0 0.0
    %808 = vmatprep.subr.mxu0 0.0
    %809 = vmatpush1.xpose.msra.mxu0 0.0
    %810 = vmatprep.subr.mxu0 0.0
    %811 = vmatpush1.xpose.msra.mxu0 0.0
    %812 = vmatprep.mubr.f32.mxu0 0.0
    %813 = vmatmul.mubr.f32.gmra.mrb[0].mxu0 %v740
    %v814 = vpop.f32.mrb[0].mxu0
    %v815 = vadd.f32 %v164, %v814
    %v816 = vpop.f32.mrb[0].mxu0
    %817 = vmatprep.mubr.f32.mxu0 0.0
    %818 = vmatmul.mubr.f32.gmra.mrb[0].mxu0 %v742
    %v819 = vpop.f32.mrb[0].mxu0
    %v820 = vadd.f32 %v165, %v819
    %v821 = vpop.f32.mrb[0].mxu0
    %822 = vdwg.mxu0
    %v823 = vsel %vm260, %v815, -inf
    %824 = vmax.xlane.f32.xlu0 %v823
    %v825 = vpop.xlane.xlu0 %824
    %v826 = vsel %vm260, %v820, -inf
    %827 = vmax.xlane.f32.xlu0 %v826
    %v828 = vpop.xlane.xlu0 %827
    %v829 = vsub.f32 %v815, %v825
    %v830 = vsub.f32 %v820, %v828
    %v831 = vmul.f32 %v829, 1.442695
    %v832 = vpow.pop %v831
    %v833 = vmul.f32 %v830, 1.442695
    %v834 = vpow.pop %v833
    %v835 = vsel %vm260, %v832, 0.0
    %836 = vadd.xlane.f32.xlu0 %v835
    %v837 = vpop.xlane.xlu0 %836
    %v838 = vsel %vm260, %v834, 0.0
    %839 = vadd.xlane.f32.xlu0 %v838
    %v840 = vpop.xlane.xlu0 %839
    %v841 = vrcp.pop %v837
    %v842 = vrcp.pop %v840
    %v843 = vmul.f32 %v832, %v841
    %v844 = vmul.f32 %v834, %v842
    %845 = vrot.lane.b32.xlu0 %v156, 48
    %v846 = vpop.permute.xlu0 %845
    %847 = vrot.lane.b32.xlu0 %v161, 48
    %v848 = vpop.permute.xlu0 %847
    %v852 = vsel %vm260, %v843, 0
    %v855 = vsel %vm260, %v844, 0
    %857 = vmatprep.subr.mxu0 0.0
    %858 = vmatpush1.msra.mxu0 %v846
    %859 = vmatprep.subr.mxu0 0.0
    %860 = vmatpush1.msra.mxu0 %v848
    %861 = vmatprep.subr.mxu0 0.0
    %862 = vmatpush1.msra.mxu0 0.0
    %863 = vmatprep.subr.mxu0 0.0
    %864 = vmatpush1.msra.mxu0 0.0
    %865 = vmatprep.subr.mxu0 0.0
    %866 = vmatpush1.msra.mxu0 0.0
    %867 = vmatprep.subr.mxu0 0.0
    %868 = vmatpush1.msra.mxu0 0.0
    %869 = vmatprep.subr.mxu0 0.0
    %870 = vmatpush1.msra.mxu0 0.0
    %871 = vmatprep.subr.mxu0 0.0
    %872 = vmatpush1.msra.mxu0 0.0
    %873 = vmatprep.subr.mxu0 0.0
    %874 = vmatpush1.msra.mxu0 0.0
    %875 = vmatprep.subr.mxu0 0.0
    %876 = vmatpush1.msra.mxu0 0.0
    %877 = vmatprep.subr.mxu0 0.0
    %878 = vmatpush1.msra.mxu0 0.0
    %879 = vmatprep.subr.mxu0 0.0
    %880 = vmatpush1.msra.mxu0 0.0
    %881 = vmatprep.subr.mxu0 0.0
    %882 = vmatpush1.msra.mxu0 0.0
    %883 = vmatprep.subr.mxu0 0.0
    %884 = vmatpush1.msra.mxu0 0.0
    %885 = vmatprep.subr.mxu0 0.0
    %886 = vmatpush1.msra.mxu0 0.0
    %887 = vmatprep.subr.mxu0 0.0
    %888 = vmatpush1.msra.mxu0 0.0
    %889 = vmatprep.subr.mxu0 0.0
    %890 = vmatpush1.msra.mxu0 0.0
    %891 = vmatprep.subr.mxu0 0.0
    %892 = vmatpush1.msra.mxu0 0.0
    %893 = vmatprep.subr.mxu0 0.0
    %894 = vmatpush1.msra.mxu0 0.0
    %895 = vmatprep.subr.mxu0 0.0
    %896 = vmatpush1.msra.mxu0 0.0
    %897 = vmatprep.subr.mxu0 0.0
    %898 = vmatpush1.msra.mxu0 0.0
    %899 = vmatprep.subr.mxu0 0.0
    %900 = vmatpush1.msra.mxu0 0.0
    %901 = vmatprep.subr.mxu0 0.0
    %902 = vmatpush1.msra.mxu0 0.0
    %903 = vmatprep.subr.mxu0 0.0
    %904 = vmatpush1.msra.mxu0 0.0
    %905 = vmatprep.subr.mxu0 0.0
    %906 = vmatpush1.msra.mxu0 0.0
    %907 = vmatprep.subr.mxu0 0.0
    %908 = vmatpush1.msra.mxu0 0.0
    %909 = vmatprep.subr.mxu0 0.0
    %910 = vmatpush1.msra.mxu0 0.0
    %911 = vmatprep.subr.mxu0 0.0
    %912 = vmatpush1.msra.mxu0 0.0
    %913 = vmatprep.subr.mxu0 0.0
    %914 = vmatpush1.msra.mxu0 0.0
    %915 = vmatprep.subr.mxu0 0.0
    %916 = vmatpush1.msra.mxu0 0.0
    %917 = vmatprep.subr.mxu0 0.0
    %918 = vmatpush1.msra.mxu0 0.0
    %919 = vmatprep.subr.mxu0 0.0
    %920 = vmatpush1.msra.mxu0 0.0
    %921 = vmatprep.mubr.f32.mxu0 0.0
    %922 = vmatmul.mubr.f32.gmra.mrb[0].mxu0 %v852
    %v923 = vpop.f32.mrb[0].mxu0
    %v924 = vadd.f32 0.0, %v923
    %v925 = vpop.f32.mrb[0].mxu0
    %926 = vmatprep.mubr.f32.mxu0 0.0
    %927 = vmatmul.mubr.f32.gmra.mrb[0].mxu0 %v855
    %v928 = vpop.f32.mrb[0].mxu0
    %v929 = vadd.f32 0.0, %v928
    %v930 = vpop.f32.mrb[0].mxu0
    %931 = vdwg.mxu0
    %v933 = vsel %vm176, %v924, 0
    %v936 = vsel %vm176, %v929, 0
    %938 = vmatprep.subr.mxu0 0.0
    %939 = vmatpush1.msra.mxu0 %v168
    %940 = vmatprep.subr.mxu0 0.0
    %941 = vmatpush1.msra.mxu0 0.0
    %942 = vmatprep.subr.mxu0 0.0
    %943 = vmatpush1.msra.mxu0 0.0
    %944 = vmatprep.subr.mxu0 0.0
    %945 = vmatpush1.msra.mxu0 0.0
    %946 = vmatprep.subr.mxu0 0.0
    %947 = vmatpush1.msra.mxu0 0.0
    %948 = vmatprep.subr.mxu0 0.0
    %949 = vmatpush1.msra.mxu0 0.0
    %950 = vmatprep.subr.mxu0 0.0
    %951 = vmatpush1.msra.mxu0 0.0
    %952 = vmatprep.subr.mxu0 0.0
    %953 = vmatpush1.msra.mxu0 0.0
    %954 = vmatprep.subr.mxu0 0.0
    %955 = vmatpush1.msra.mxu0 0.0
    %956 = vmatprep.subr.mxu0 0.0
    %957 = vmatpush1.msra.mxu0 0.0
    %958 = vmatprep.subr.mxu0 0.0
    %959 = vmatpush1.msra.mxu0 0.0
    %960 = vmatprep.subr.mxu0 0.0
    %961 = vmatpush1.msra.mxu0 0.0
    %962 = vmatprep.subr.mxu0 0.0
    %963 = vmatpush1.msra.mxu0 0.0
    %964 = vmatprep.subr.mxu0 0.0
    %965 = vmatpush1.msra.mxu0 0.0
    %966 = vmatprep.subr.mxu0 0.0
    %967 = vmatpush1.msra.mxu0 0.0
    %968 = vmatprep.subr.mxu0 0.0
    %969 = vmatpush1.msra.mxu0 0.0
    %970 = vmatprep.subr.mxu0 0.0
    %971 = vmatpush1.msra.mxu0 0.0
    %972 = vmatprep.subr.mxu0 0.0
    %973 = vmatpush1.msra.mxu0 0.0
    %974 = vmatprep.subr.mxu0 0.0
    %975 = vmatpush1.msra.mxu0 0.0
    %976 = vmatprep.subr.mxu0 0.0
    %977 = vmatpush1.msra.mxu0 0.0
    %978 = vmatprep.subr.mxu0 0.0
    %979 = vmatpush1.msra.mxu0 0.0
    %980 = vmatprep.subr.mxu0 0.0
    %981 = vmatpush1.msra.mxu0 0.0
    %982 = vmatprep.subr.mxu0 0.0
    %983 = vmatpush1.msra.mxu0 0.0
    %984 = vmatprep.subr.mxu0 0.0
    %985 = vmatpush1.msra.mxu0 0.0
    %986 = vmatprep.subr.mxu0 0.0
    %987 = vmatpush1.msra.mxu0 0.0
    %988 = vmatprep.subr.mxu0 0.0
    %989 = vmatpush1.msra.mxu0 0.0
    %990 = vmatprep.subr.mxu0 0.0
    %991 = vmatpush1.msra.mxu0 0.0
    %992 = vmatprep.subr.mxu0 0.0
    %993 = vmatpush1.msra.mxu0 0.0
    %994 = vmatprep.subr.mxu0 0.0
    %995 = vmatpush1.msra.mxu0 0.0
    %996 = vmatprep.subr.mxu0 0.0
    %997 = vmatpush1.msra.mxu0 0.0
    %998 = vmatprep.subr.mxu0 0.0
    %999 = vmatpush1.msra.mxu0 0.0
    %1000 = vmatprep.subr.mxu0 0.0
    %1001 = vmatpush1.msra.mxu0 0.0
    %1002 = vmatprep.mubr.f32.mxu0 0.0
    %1003 = vmatmul.mubr.f32.gmra.mrb[0].mxu0 %v933
    %v1004 = vpop.f32.mrb[0].mxu0
    %v1005 = vadd.f32 0.0, %v1004
    %v1006 = vpop.f32.mrb[0].mxu0
    %1007 = vmatprep.mubr.f32.mxu0 0.0
    %1008 = vmatmul.mubr.f32.gmra.mrb[0].mxu0 %v936
    %v1009 = vpop.f32.mrb[0].mxu0
    %v1010 = vadd.f32 0.0, %v1009
    %v1011 = vpop.f32.mrb[0].mxu0
    %1012 = vdwg.mxu0
    %v1013 = vadd.f32 %v724, %v1005
    %v1014 = vadd.f32 %v729, %v1010
    %1015 = vrot.lane.b32.xlu0 %v156, 104
    %v1016 = vpop.permute.xlu0 %1015
    %1017 = vrot.lane.b32.xlu0 %v161, 104
    %v1018 = vpop.permute.xlu0 %1017
    %1019 = vrot.lane.b32.xlu0 %v156, 72
    %v1020 = vpop.permute.xlu0 %1019
    %1021 = vrot.lane.b32.xlu0 %v161, 72
    %v1022 = vpop.permute.xlu0 %1021
    %v1023 = vsel %vm176, %v1016, 0
    %v1025 = vsel %vm176, %v1018, 0
    %v1027 = vsel %vm176, %v1020, 0
    %v1029 = vsel %vm176, %v1022, 0
    %1031 = vmatprep.subr.mxu0 0.0
    %1032 = vmatpush1.xpose.msra.mxu0 %v1027
    %1033 = vmatprep.subr.mxu0 0.0
    %1034 = vmatpush1.xpose.msra.mxu0 %v1029
    %1035 = vmatprep.subr.mxu0 0.0
    %1036 = vmatpush1.xpose.msra.mxu0 0.0
    %1037 = vmatprep.subr.mxu0 0.0
    %1038 = vmatpush1.xpose.msra.mxu0 0.0
    %1039 = vmatprep.subr.mxu0 0.0
    %1040 = vmatpush1.xpose.msra.mxu0 0.0
    %1041 = vmatprep.subr.mxu0 0.0
    %1042 = vmatpush1.xpose.msra.mxu0 0.0
    %1043 = vmatprep.subr.mxu0 0.0
    %1044 = vmatpush1.xpose.msra.mxu0 0.0
    %1045 = vmatprep.subr.mxu0 0.0
    %1046 = vmatpush1.xpose.msra.mxu0 0.0
    %1047 = vmatprep.subr.mxu0 0.0
    %1048 = vmatpush1.xpose.msra.mxu0 0.0
    %1049 = vmatprep.subr.mxu0 0.0
    %1050 = vmatpush1.xpose.msra.mxu0 0.0
    %1051 = vmatprep.subr.mxu0 0.0
    %1052 = vmatpush1.xpose.msra.mxu0 0.0
    %1053 = vmatprep.subr.mxu0 0.0
    %1054 = vmatpush1.xpose.msra.mxu0 0.0
    %1055 = vmatprep.subr.mxu0 0.0
    %1056 = vmatpush1.xpose.msra.mxu0 0.0
    %1057 = vmatprep.subr.mxu0 0.0
    %1058 = vmatpush1.xpose.msra.mxu0 0.0
    %1059 = vmatprep.subr.mxu0 0.0
    %1060 = vmatpush1.xpose.msra.mxu0 0.0
    %1061 = vmatprep.subr.mxu0 0.0
    %1062 = vmatpush1.xpose.msra.mxu0 0.0
    %1063 = vmatprep.subr.mxu0 0.0
    %1064 = vmatpush1.xpose.msra.mxu0 0.0
    %1065 = vmatprep.subr.mxu0 0.0
    %1066 = vmatpush1.xpose.msra.mxu0 0.0
    %1067 = vmatprep.subr.mxu0 0.0
    %1068 = vmatpush1.xpose.msra.mxu0 0.0
    %1069 = vmatprep.subr.mxu0 0.0
    %1070 = vmatpush1.xpose.msra.mxu0 0.0
    %1071 = vmatprep.subr.mxu0 0.0
    %1072 = vmatpush1.xpose.msra.mxu0 0.0
    %1073 = vmatprep.subr.mxu0 0.0
    %1074 = vmatpush1.xpose.msra.mxu0 0.0
    %1075 = vmatprep.subr.mxu0 0.0
    %1076 = vmatpush1.xpose.msra.mxu0 0.0
    %1077 = vmatprep.subr.mxu0 0.0
    %1078 = vmatpush1.xpose.msra.mxu0 0.0
    %1079 = vmatprep.subr.mxu0 0.0
    %1080 = vmatpush1.xpose.msra.mxu0 0.0
    %1081 = vmatprep.subr.mxu0 0.0
    %1082 = vmatpush1.xpose.msra.mxu0 0.0
    %1083 = vmatprep.subr.mxu0 0.0
    %1084 = vmatpush1.xpose.msra.mxu0 0.0
    %1085 = vmatprep.subr.mxu0 0.0
    %1086 = vmatpush1.xpose.msra.mxu0 0.0
    %1087 = vmatprep.subr.mxu0 0.0
    %1088 = vmatpush1.xpose.msra.mxu0 0.0
    %1089 = vmatprep.subr.mxu0 0.0
    %1090 = vmatpush1.xpose.msra.mxu0 0.0
    %1091 = vmatprep.subr.mxu0 0.0
    %1092 = vmatpush1.xpose.msra.mxu0 0.0
    %1093 = vmatprep.subr.mxu0 0.0
    %1094 = vmatpush1.xpose.msra.mxu0 0.0
    %1095 = vmatprep.mubr.f32.mxu0 0.0
    %1096 = vmatmul.mubr.f32.gmra.mrb[0].mxu0 %v1023
    %v1097 = vpop.f32.mrb[0].mxu0
    %v1098 = vadd.f32 %v164, %v1097
    %v1099 = vpop.f32.mrb[0].mxu0
    %1100 = vmatprep.mubr.f32.mxu0 0.0
    %1101 = vmatmul.mubr.f32.gmra.mrb[0].mxu0 %v1025
    %v1102 = vpop.f32.mrb[0].mxu0
    %v1103 = vadd.f32 %v165, %v1102
    %v1104 = vpop.f32.mrb[0].mxu0
    %1105 = vdwg.mxu0
    %v1106 = vsel %vm260, %v1098, -inf
    %1107 = vmax.xlane.f32.xlu0 %v1106
    %v1108 = vpop.xlane.xlu0 %1107
    %v1109 = vsel %vm260, %v1103, -inf
    %1110 = vmax.xlane.f32.xlu0 %v1109
    %v1111 = vpop.xlane.xlu0 %1110
    %v1112 = vsub.f32 %v1098, %v1108
    %v1113 = vsub.f32 %v1103, %v1111
    %v1114 = vmul.f32 %v1112, 1.442695
    %v1115 = vpow.pop %v1114
    %v1116 = vmul.f32 %v1113, 1.442695
    %v1117 = vpow.pop %v1116
    %v1118 = vsel %vm260, %v1115, 0.0
    %1119 = vadd.xlane.f32.xlu0 %v1118
    %v1120 = vpop.xlane.xlu0 %1119
    %v1121 = vsel %vm260, %v1117, 0.0
    %1122 = vadd.xlane.f32.xlu0 %v1121
    %v1123 = vpop.xlane.xlu0 %1122
    %v1124 = vrcp.pop %v1120
    %v1125 = vrcp.pop %v1123
    %v1126 = vmul.f32 %v1115, %v1124
    %v1127 = vmul.f32 %v1117, %v1125
    %1128 = vrot.lane.b32.xlu0 %v156, 40
    %v1129 = vpop.permute.xlu0 %1128
    %1130 = vrot.lane.b32.xlu0 %v161, 40
    %v1131 = vpop.permute.xlu0 %1130
    %v1135 = vsel %vm260, %v1126, 0
    %v1138 = vsel %vm260, %v1127, 0
    %1140 = vmatprep.subr.mxu0 0.0
    %1141 = vmatpush1.msra.mxu0 %v1129
    %1142 = vmatprep.subr.mxu0 0.0
    %1143 = vmatpush1.msra.mxu0 %v1131
    %1144 = vmatprep.subr.mxu0 0.0
    %1145 = vmatpush1.msra.mxu0 0.0
    %1146 = vmatprep.subr.mxu0 0.0
    %1147 = vmatpush1.msra.mxu0 0.0
    %1148 = vmatprep.subr.mxu0 0.0
    %1149 = vmatpush1.msra.mxu0 0.0
    %1150 = vmatprep.subr.mxu0 0.0
    %1151 = vmatpush1.msra.mxu0 0.0
    %1152 = vmatprep.subr.mxu0 0.0
    %1153 = vmatpush1.msra.mxu0 0.0
    %1154 = vmatprep.subr.mxu0 0.0
    %1155 = vmatpush1.msra.mxu0 0.0
    %1156 = vmatprep.subr.mxu0 0.0
    %1157 = vmatpush1.msra.mxu0 0.0
    %1158 = vmatprep.subr.mxu0 0.0
    %1159 = vmatpush1.msra.mxu0 0.0
    %1160 = vmatprep.subr.mxu0 0.0
    %1161 = vmatpush1.msra.mxu0 0.0
    %1162 = vmatprep.subr.mxu0 0.0
    %1163 = vmatpush1.msra.mxu0 0.0
    %1164 = vmatprep.subr.mxu0 0.0
    %1165 = vmatpush1.msra.mxu0 0.0
    %1166 = vmatprep.subr.mxu0 0.0
    %1167 = vmatpush1.msra.mxu0 0.0
    %1168 = vmatprep.subr.mxu0 0.0
    %1169 = vmatpush1.msra.mxu0 0.0
    %1170 = vmatprep.subr.mxu0 0.0
    %1171 = vmatpush1.msra.mxu0 0.0
    %1172 = vmatprep.subr.mxu0 0.0
    %1173 = vmatpush1.msra.mxu0 0.0
    %1174 = vmatprep.subr.mxu0 0.0
    %1175 = vmatpush1.msra.mxu0 0.0
    %1176 = vmatprep.subr.mxu0 0.0
    %1177 = vmatpush1.msra.mxu0 0.0
    %1178 = vmatprep.subr.mxu0 0.0
    %1179 = vmatpush1.msra.mxu0 0.0
    %1180 = vmatprep.subr.mxu0 0.0
    %1181 = vmatpush1.msra.mxu0 0.0
    %1182 = vmatprep.subr.mxu0 0.0
    %1183 = vmatpush1.msra.mxu0 0.0
    %1184 = vmatprep.subr.mxu0 0.0
    %1185 = vmatpush1.msra.mxu0 0.0
    %1186 = vmatprep.subr.mxu0 0.0
    %1187 = vmatpush1.msra.mxu0 0.0
    %1188 = vmatprep.subr.mxu0 0.0
    %1189 = vmatpush1.msra.mxu0 0.0
    %1190 = vmatprep.subr.mxu0 0.0
    %1191 = vmatpush1.msra.mxu0 0.0
    %1192 = vmatprep.subr.mxu0 0.0
    %1193 = vmatpush1.msra.mxu0 0.0
    %1194 = vmatprep.subr.mxu0 0.0
    %1195 = vmatpush1.msra.mxu0 0.0
    %1196 = vmatprep.subr.mxu0 0.0
    %1197 = vmatpush1.msra.mxu0 0.0
    %1198 = vmatprep.subr.mxu0 0.0
    %1199 = vmatpush1.msra.mxu0 0.0
    %1200 = vmatprep.subr.mxu0 0.0
    %1201 = vmatpush1.msra.mxu0 0.0
    %1202 = vmatprep.subr.mxu0 0.0
    %1203 = vmatpush1.msra.mxu0 0.0
    %1204 = vmatprep.mubr.f32.mxu0 0.0
    %1205 = vmatmul.mubr.f32.gmra.mrb[0].mxu0 %v1135
    %v1206 = vpop.f32.mrb[0].mxu0
    %v1207 = vadd.f32 0.0, %v1206
    %v1208 = vpop.f32.mrb[0].mxu0
    %1209 = vmatprep.mubr.f32.mxu0 0.0
    %1210 = vmatmul.mubr.f32.gmra.mrb[0].mxu0 %v1138
    %v1211 = vpop.f32.mrb[0].mxu0
    %v1212 = vadd.f32 0.0, %v1211
    %v1213 = vpop.f32.mrb[0].mxu0
    %1214 = vdwg.mxu0
    %v1216 = vsel %vm176, %v1207, 0
    %v1219 = vsel %vm176, %v1212, 0
    %1221 = vmatprep.subr.mxu0 0.0
    %1222 = vmatpush1.msra.mxu0 %v169
    %1223 = vmatprep.subr.mxu0 0.0
    %1224 = vmatpush1.msra.mxu0 0.0
    %1225 = vmatprep.subr.mxu0 0.0
    %1226 = vmatpush1.msra.mxu0 0.0
    %1227 = vmatprep.subr.mxu0 0.0
    %1228 = vmatpush1.msra.mxu0 0.0
    %1229 = vmatprep.subr.mxu0 0.0
    %1230 = vmatpush1.msra.mxu0 0.0
    %1231 = vmatprep.subr.mxu0 0.0
    %1232 = vmatpush1.msra.mxu0 0.0
    %1233 = vmatprep.subr.mxu0 0.0
    %1234 = vmatpush1.msra.mxu0 0.0
    %1235 = vmatprep.subr.mxu0 0.0
    %1236 = vmatpush1.msra.mxu0 0.0
    %1237 = vmatprep.subr.mxu0 0.0
    %1238 = vmatpush1.msra.mxu0 0.0
    %1239 = vmatprep.subr.mxu0 0.0
    %1240 = vmatpush1.msra.mxu0 0.0
    %1241 = vmatprep.subr.mxu0 0.0
    %1242 = vmatpush1.msra.mxu0 0.0
    %1243 = vmatprep.subr.mxu0 0.0
    %1244 = vmatpush1.msra.mxu0 0.0
    %1245 = vmatprep.subr.mxu0 0.0
    %1246 = vmatpush1.msra.mxu0 0.0
    %1247 = vmatprep.subr.mxu0 0.0
    %1248 = vmatpush1.msra.mxu0 0.0
    %1249 = vmatprep.subr.mxu0 0.0
    %1250 = vmatpush1.msra.mxu0 0.0
    %1251 = vmatprep.subr.mxu0 0.0
    %1252 = vmatpush1.msra.mxu0 0.0
    %1253 = vmatprep.subr.mxu0 0.0
    %1254 = vmatpush1.msra.mxu0 0.0
    %1255 = vmatprep.subr.mxu0 0.0
    %1256 = vmatpush1.msra.mxu0 0.0
    %1257 = vmatprep.subr.mxu0 0.0
    %1258 = vmatpush1.msra.mxu0 0.0
    %1259 = vmatprep.subr.mxu0 0.0
    %1260 = vmatpush1.msra.mxu0 0.0
    %1261 = vmatprep.subr.mxu0 0.0
    %1262 = vmatpush1.msra.mxu0 0.0
    %1263 = vmatprep.subr.mxu0 0.0
    %1264 = vmatpush1.msra.mxu0 0.0
    %1265 = vmatprep.subr.mxu0 0.0
    %1266 = vmatpush1.msra.mxu0 0.0
    %1267 = vmatprep.subr.mxu0 0.0
    %1268 = vmatpush1.msra.mxu0 0.0
    %1269 = vmatprep.subr.mxu0 0.0
    %1270 = vmatpush1.msra.mxu0 0.0
    %1271 = vmatprep.subr.mxu0 0.0
    %1272 = vmatpush1.msra.mxu0 0.0
    %1273 = vmatprep.subr.mxu0 0.0
    %1274 = vmatpush1.msra.mxu0 0.0
    %1275 = vmatprep.subr.mxu0 0.0
    %1276 = vmatpush1.msra.mxu0 0.0
    %1277 = vmatprep.subr.mxu0 0.0
    %1278 = vmatpush1.msra.mxu0 0.0
    %1279 = vmatprep.subr.mxu0 0.0
    %1280 = vmatpush1.msra.mxu0 0.0
    %1281 = vmatprep.subr.mxu0 0.0
    %1282 = vmatpush1.msra.mxu0 0.0
    %1283 = vmatprep.subr.mxu0 0.0
    %1284 = vmatpush1.msra.mxu0 0.0
    %1285 = vmatprep.mubr.f32.mxu0 0.0
    %1286 = vmatmul.mubr.f32.gmra.mrb[0].mxu0 %v1216
    %v1287 = vpop.f32.mrb[0].mxu0
    %v1288 = vadd.f32 0.0, %v1287
    %v1289 = vpop.f32.mrb[0].mxu0
    %1290 = vmatprep.mubr.f32.mxu0 0.0
    %1291 = vmatmul.mubr.f32.gmra.mrb[0].mxu0 %v1219
    %v1292 = vpop.f32.mrb[0].mxu0
    %v1293 = vadd.f32 0.0, %v1292
    %v1294 = vpop.f32.mrb[0].mxu0
    %1295 = vdwg.mxu0
    %v1296 = vadd.f32 %v1013, %v1288
    %v1297 = vadd.f32 %v1014, %v1293
    %v1298 = vld [vmem:[%s3] sm:$0x1]
    %v1300 = vlaneseq
    %v1301 = vshrl.u32 %v1300, 7
    %v1302 = vsub.s32 0, %v1301
    %v1303 = vrot.slane %v1298, %v1302
    %v1305 = vadd.f32 %v1296, %v1303
    %v1306 = vadd.f32 %v1297, %v1303
    %1307 = vst.msk [vmem:[#allocation10] sm:$0xff] %vm82, %v1305
    %1308 = vst.msk [vmem:[#allocation10 + $0x8] sm:$0xff] %vm82, %v1306
    // Predicated region
    $region38: #{tpu_custom_call.1} parent=1 // pred_check
      _
    $region39: #{tpu_custom_call.1} parent=1 // pred_check_branch
      %1310 = sbr.rel (0) target = $region41
    $region40: #{tpu_custom_call.1} parent=1 // pred_region
      %s1312 = ssub.s32 256, 256
      %1313 = vsyncadd [#allocation4], %s1312
      %s1314 = sshll.u32 [#allocation10], 4
      %s1315 = int_to_ptr.vmem [resolvable:$true] %s1314
      %1320 = dma.vmem_to_hbm [thread:$0]  %s1315, 256, %s5, [#allocation4], 128, 128, 8
    $region41: #{tpu_custom_call.1} parent=1 // pred_fallthru
      _
    // Predicated region
    $region42: #{tpu_custom_call.1} parent=1 // pred_check
      _
    $region43: #{tpu_custom_call.1} parent=1 // pred_check_branch
      %1322 = sbr.rel (0) target = $region45
    $region44: #{tpu_custom_call.1} parent=1 // pred_region
      %1323 = dma.done [#allocation4], 256
    $region45: #{tpu_custom_call.1} parent=1 // pred_fallthru
      _
    %1324 = vsyncpa [#allocation3], 1
    %1325 = vsyncpa [#allocation6], 1
    %1326 = vsyncpa [#allocation9], 1
    %1327 = vsyncpa [#allocation4], 1

</llo_original>
